<compile_context>
chip_gen: v6e
topology: v6e:2x2x1
jax: 0.10.0
libtpu: 0.0.40
codegen_flags: <defaults>
</compile_context>

<pallas_src>
import jax
import jax.numpy as jnp
from jax.experimental import pallas as pl
from jax.experimental.pallas import tpu as pltpu

IN_FEATURES = 28 * 28   # 784
HID1 = 512
HID2 = 512
OUT_FEATURES = 10
OUT_PAD = 128           # pad the 10-wide logits to a full 128-lane output
TB_CAP = 512            # fits comfortably inside v5e's 16 MiB scoped-VMEM default


def _round_up(n, m):
    return ((n + m - 1) // m) * m


def _pick_tb(B):
    """Batch tile: 8-row aligned, capped at TB_CAP.  For B > 256 split into
    at least 2 tiles so both v7x TensorCores get work via the 'parallel'
    batch axis; single-TC chips only pay ~0.35 us extra per step."""
    if B <= 256:
        return _round_up(B, 8)
    return min(TB_CAP, _round_up(pl.cdiv(B, 2), 8))


def mlp_kernel(x_ref, w1_ref, b1_ref, w2_ref, b2_ref, w3_ref, b3_ref, o_ref):
    # x_ref: (TB, 784) f32 ; w*: bf16 (in, out) ; b*: f32 (1, out)
    # o_ref: (TB, 128) f32 (lane-dense padded logits)
    x = x_ref[...].astype(jnp.bfloat16)
    h1 = jnp.dot(x, w1_ref[...], preferred_element_type=jnp.float32) + b1_ref[...]
    h1 = jnp.maximum(h1, 0.0).astype(jnp.bfloat16)
    h2 = jnp.dot(h1, w2_ref[...], preferred_element_type=jnp.float32) + b2_ref[...]
    h2 = jnp.maximum(h2, 0.0).astype(jnp.bfloat16)
    logits = jnp.dot(h2, w3_ref[...], preferred_element_type=jnp.float32) + b3_ref[...]
    o_ref[...] = logits.astype(o_ref.dtype)


def prepare_params(params):
    """One-time conversion of PyTorch-layout params ((out,in) W, (out,) b, f32)
    into kernel layout: (in,out) bf16 weights, (1,out) f32 biases, last layer
    zero-padded from 10 to 128 output lanes."""
    (w1, b1), (w2, b2), (w3, b3) = params
    w1t = jnp.asarray(w1.T, jnp.bfloat16)                                 # (784, 512)
    w2t = jnp.asarray(w2.T, jnp.bfloat16)                                 # (512, 512)
    w3t = jnp.zeros((w3.shape[1], OUT_PAD), jnp.bfloat16)
    w3t = w3t.at[:, :OUT_FEATURES].set(jnp.asarray(w3.T, jnp.bfloat16))   # (512, 128)
    b1r = jnp.asarray(b1, jnp.float32).reshape(1, -1)
    b2r = jnp.asarray(b2, jnp.float32).reshape(1, -1)
    b3r = jnp.zeros((1, OUT_PAD), jnp.float32).at[:, :OUT_FEATURES].set(b3)
    return (w1t, b1r, w2t, b2r, w3t, b3r)


@jax.jit
def neural_network_forward(x_nchw, prepared):
    """Forward pass of NeuralNetwork on prepared (kernel-layout) params."""
    w1t, b1r, w2t, b2r, w3t, b3r = prepared
    B = x_nchw.shape[0]
    x = x_nchw.reshape(B, -1).astype(jnp.float32)   # nn.Flatten(): (B, 784)
    K = x.shape[1]
    h1 = w1t.shape[1]
    h2 = w2t.shape[1]

    TB = _pick_tb(B)
    n_b = pl.cdiv(B, TB)   # ragged last block: padded reads, masked writes

    const2d = lambda i: (0, 0)   # weights/biases: same block every step -> resident
    single = pl.Buffered(buffer_count=1)  # constant-index blocks need no double buffer

    flops = 2 * B * (K * h1 + h1 * h2 + h2 * OUT_PAD)
    weight_bytes = (K * h1 + h1 * h2 + h2 * OUT_PAD) * 2 + (h1 + h2 + OUT_PAD) * 4
    bytes_accessed = B * K * 4 + weight_bytes + B * OUT_PAD * 4
    cost = pl.CostEstimate(flops=flops, transcendentals=0,
                           bytes_accessed=bytes_accessed)

    out = pl.pallas_call(
        mlp_kernel,
        out_shape=jax.ShapeDtypeStruct((B, OUT_PAD), jnp.float32),
        grid=(n_b,),
        in_specs=[
            pl.BlockSpec((TB, K), lambda i: (i, 0)),   # x tiles stream over batch
            pl.BlockSpec((K, h1), const2d, pipeline_mode=single),
            pl.BlockSpec((1, h1), const2d, pipeline_mode=single),
            pl.BlockSpec((h1, h2), const2d, pipeline_mode=single),
            pl.BlockSpec((1, h2), const2d, pipeline_mode=single),
            pl.BlockSpec((h2, OUT_PAD), const2d, pipeline_mode=single),
            pl.BlockSpec((1, OUT_PAD), const2d, pipeline_mode=single),
        ],
        out_specs=pl.BlockSpec((TB, OUT_PAD), lambda i: (i, 0)),
        compiler_params=pltpu.CompilerParams(
            dimension_semantics=("parallel",),
        ),
        cost_estimate=cost,
    )(x, w1t, b1r, w2t, b2r, w3t, b3r)

    return out[:, :OUT_FEATURES]


def init_params(key):
    """Deterministic init matching PyTorch nn.Linear default (uniform
    +/- 1/sqrt(fan_in)) for (out, in) weights and (out,) biases."""
    sizes = [(HID1, IN_FEATURES), (HID2, HID1), (OUT_FEATURES, HID2)]
    params = []
    for out_f, in_f in sizes:
        key, kw, kb = jax.random.split(key, 3)
        bound = 1.0 / (in_f ** 0.5)
        w = jax.random.uniform(kw, (out_f, in_f), jnp.float32, -bound, bound)
        b = jax.random.uniform(kb, (out_f,), jnp.float32, -bound, bound)
        params.append((w, b))
    return params


if __name__ == "__main__":
    key = jax.random.PRNGKey(0)
    kx, kp = jax.random.split(key)

    B = 8
    x = jax.random.normal(kx, (B, 1, 28, 28), jnp.float32)  # NCHW
    params = init_params(kp)
    prepared = prepare_params(params)  # one-time layout/dtype conversion

    logits = neural_network_forward(x, prepared)
    jax.block_until_ready(logits)
    assert logits.shape == (B, OUT_FEATURES)

    (w1, b1), (w2, b2), (w3, b3) = params
    xf = x.reshape(B, -1)

    # Reference 1: same bf16-weight / f32-accumulate numerics in plain JAX.
    w1b, w2b, w3b = (w1.T.astype(jnp.bfloat16), w2.T.astype(jnp.bfloat16),
                     w3.T.astype(jnp.bfloat16))
    h1 = jnp.maximum(jnp.dot(xf.astype(jnp.bfloat16), w1b,
                             preferred_element_type=jnp.float32) + b1, 0.0)
    h2 = jnp.maximum(jnp.dot(h1.astype(jnp.bfloat16), w2b,
                             preferred_element_type=jnp.float32) + b2, 0.0)
    ref_bf16 = jnp.dot(h2.astype(jnp.bfloat16), w3b,
                       preferred_element_type=jnp.float32) + b3
    assert jnp.allclose(logits, ref_bf16, atol=2e-3, rtol=2e-3)

    # Reference 2: full-f32 PyTorch semantics (looser tol due to bf16 weights).
    h1f = jnp.maximum(xf @ w1.T + b1, 0.0)
    h2f = jnp.maximum(h1f @ w2.T + b2, 0.0)
    ref_f32 = h2f @ w3.T + b3
    assert jnp.allclose(logits, ref_f32, atol=5e-2, rtol=5e-2)

    print("KERNEL_OK")
</pallas_src>

<mosaic_0001>
module attributes {stable_mosaic.version = 11 : i64} {
  func.func @mlp_kernel(%arg0: i32, %arg1: memref<8x784xf32, #tpu.memory_space<vmem>>, %arg2: memref<784x512xbf16, #tpu.memory_space<vmem>>, %arg3: memref<1x512xf32, #tpu.memory_space<vmem>>, %arg4: memref<512x512xbf16, #tpu.memory_space<vmem>>, %arg5: memref<1x512xf32, #tpu.memory_space<vmem>>, %arg6: memref<512x128xbf16, #tpu.memory_space<vmem>>, %arg7: memref<1x128xf32, #tpu.memory_space<vmem>>, %arg8: memref<8x128xf32, #tpu.memory_space<vmem>>) attributes {dimension_semantics = [#tpu.dimension_semantics<parallel>], iteration_bounds = array<i64: 1>, scalar_prefetch = 0 : i64, scratch_operands = 0 : i64, tpu.core_type = #tpu.core_type<tc>, window_params = [{transform_indices = @transform_0, window_bounds = array<i64: 8, 784>}, {pipeline_mode = #tpu.pipeline_mode<synchronous>, transform_indices = @transform_1, window_bounds = array<i64: 784, 512>}, {pipeline_mode = #tpu.pipeline_mode<synchronous>, transform_indices = @transform_2, window_bounds = array<i64: 1, 512>}, {pipeline_mode = #tpu.pipeline_mode<synchronous>, transform_indices = @transform_3, window_bounds = array<i64: 512, 512>}, {pipeline_mode = #tpu.pipeline_mode<synchronous>, transform_indices = @transform_4, window_bounds = array<i64: 1, 512>}, {pipeline_mode = #tpu.pipeline_mode<synchronous>, transform_indices = @transform_5, window_bounds = array<i64: 512, 128>}, {pipeline_mode = #tpu.pipeline_mode<synchronous>, transform_indices = @transform_6, window_bounds = array<i64: 1, 128>}, {transform_indices = @transform_7, window_bounds = array<i64: 8, 128>}]} {
    %c0 = arith.constant 0 : index
    %c0_0 = arith.constant 0 : index
    %0 = vector.load %arg1[%c0, %c0_0] : memref<8x784xf32, #tpu.memory_space<vmem>>, vector<8x784xf32>
    %1 = arith.truncf %0 : vector<8x784xf32> to vector<8x784xbf16>
    %c0_1 = arith.constant 0 : index
    %c0_2 = arith.constant 0 : index
    %2 = vector.load %arg2[%c0_1, %c0_2] : memref<784x512xbf16, #tpu.memory_space<vmem>>, vector<784x512xbf16>
    %cst = arith.constant dense<0.000000e+00> : vector<8x512xf32>
    %3 = tpu.matmul %1, %2, %cst {dimension_numbers = #tpu.dot_dimension_numbers<[1], [0], [0], [1], [0, 0, 1, 1], [], []>} : vector<8x784xbf16>, vector<784x512xbf16>, vector<8x512xf32> -> vector<8x512xf32>
    %c0_3 = arith.constant 0 : index
    %c0_4 = arith.constant 0 : index
    %4 = vector.load %arg3[%c0_3, %c0_4] : memref<1x512xf32, #tpu.memory_space<vmem>>, vector<1x512xf32>
    %5 = vector.broadcast %4 : vector<1x512xf32> to vector<8x512xf32>
    %6 = arith.addf %3, %5 : vector<8x512xf32>
    %cst_5 = arith.constant 0.000000e+00 : f32
    %7 = vector.broadcast %cst_5 : f32 to vector<8x512xf32>
    %8 = arith.maximumf %6, %7 : vector<8x512xf32>
    %9 = arith.truncf %8 : vector<8x512xf32> to vector<8x512xbf16>
    %c0_6 = arith.constant 0 : index
    %c0_7 = arith.constant 0 : index
    %10 = vector.load %arg4[%c0_6, %c0_7] : memref<512x512xbf16, #tpu.memory_space<vmem>>, vector<512x512xbf16>
    %cst_8 = arith.constant dense<0.000000e+00> : vector<8x512xf32>
    %11 = tpu.matmul %9, %10, %cst_8 {dimension_numbers = #tpu.dot_dimension_numbers<[1], [0], [0], [1], [0, 0, 1, 1], [], []>} : vector<8x512xbf16>, vector<512x512xbf16>, vector<8x512xf32> -> vector<8x512xf32>
    %c0_9 = arith.constant 0 : index
    %c0_10 = arith.constant 0 : index
    %12 = vector.load %arg5[%c0_9, %c0_10] : memref<1x512xf32, #tpu.memory_space<vmem>>, vector<1x512xf32>
    %13 = vector.broadcast %12 : vector<1x512xf32> to vector<8x512xf32>
    %14 = arith.addf %11, %13 : vector<8x512xf32>
    %cst_11 = arith.constant 0.000000e+00 : f32
    %15 = vector.broadcast %cst_11 : f32 to vector<8x512xf32>
    %16 = arith.maximumf %14, %15 : vector<8x512xf32>
    %17 = arith.truncf %16 : vector<8x512xf32> to vector<8x512xbf16>
    %c0_12 = arith.constant 0 : index
    %c0_13 = arith.constant 0 : index
    %18 = vector.load %arg6[%c0_12, %c0_13] : memref<512x128xbf16, #tpu.memory_space<vmem>>, vector<512x128xbf16>
    %cst_14 = arith.constant dense<0.000000e+00> : vector<8x128xf32>
    %19 = tpu.matmul %17, %18, %cst_14 {dimension_numbers = #tpu.dot_dimension_numbers<[1], [0], [0], [1], [0, 0, 1, 1], [], []>} : vector<8x512xbf16>, vector<512x128xbf16>, vector<8x128xf32> -> vector<8x128xf32>
    %c0_15 = arith.constant 0 : index
    %c0_16 = arith.constant 0 : index
    %20 = vector.load %arg7[%c0_15, %c0_16] : memref<1x128xf32, #tpu.memory_space<vmem>>, vector<1x128xf32>
    %21 = vector.broadcast %20 : vector<1x128xf32> to vector<8x128xf32>
    %22 = arith.addf %19, %21 : vector<8x128xf32>
    %c0_17 = arith.constant 0 : index
    %c0_18 = arith.constant 0 : index
    %23 = vector.load %arg8[%c0_17, %c0_18] : memref<8x128xf32, #tpu.memory_space<vmem>>, vector<8x128xf32>
    tpu.vector_store %arg8[%c0_17, %c0_18], %22 {strides = array<i32>} : memref<8x128xf32, #tpu.memory_space<vmem>>, vector<8x128xf32>,
    return
  }
  func.func @transform_0(%arg0: i32) -> (i32, i32) {
    %c0_i32 = arith.constant 0 : i32
    %c0_i32_0 = arith.constant 0 : i32
    return %arg0, %c0_i32 : i32, i32
  }
  func.func @transform_1(%arg0: i32) -> (i32, i32) {
    %c0_i32 = arith.constant 0 : i32
    %c0_i32_0 = arith.constant 0 : i32
    %c0_i32_1 = arith.constant 0 : i32
    return %c0_i32, %c0_i32_0 : i32, i32
  }
  func.func @transform_2(%arg0: i32) -> (i32, i32) {
    %c0_i32 = arith.constant 0 : i32
    %c0_i32_0 = arith.constant 0 : i32
    %c0_i32_1 = arith.constant 0 : i32
    return %c0_i32, %c0_i32_0 : i32, i32
  }
  func.func @transform_3(%arg0: i32) -> (i32, i32) {
    %c0_i32 = arith.constant 0 : i32
    %c0_i32_0 = arith.constant 0 : i32
    %c0_i32_1 = arith.constant 0 : i32
    return %c0_i32, %c0_i32_0 : i32, i32
  }
  func.func @transform_4(%arg0: i32) -> (i32, i32) {
    %c0_i32 = arith.constant 0 : i32
    %c0_i32_0 = arith.constant 0 : i32
    %c0_i32_1 = arith.constant 0 : i32
    return %c0_i32, %c0_i32_0 : i32, i32
  }
  func.func @transform_5(%arg0: i32) -> (i32, i32) {
    %c0_i32 = arith.constant 0 : i32
    %c0_i32_0 = arith.constant 0 : i32
    %c0_i32_1 = arith.constant 0 : i32
    return %c0_i32, %c0_i32_0 : i32, i32
  }
  func.func @transform_6(%arg0: i32) -> (i32, i32) {
    %c0_i32 = arith.constant 0 : i32
    %c0_i32_0 = arith.constant 0 : i32
    %c0_i32_1 = arith.constant 0 : i32
    return %c0_i32, %c0_i32_0 : i32, i32
  }
  func.func @transform_7(%arg0: i32) -> (i32, i32) {
    %c0_i32 = arith.constant 0 : i32
    %c0_i32_0 = arith.constant 0 : i32
    return %arg0, %c0_i32 : i32, i32
  }
}

</mosaic_0001>

<llo_original>
// kernel: neural_network_forward.1
$region0: #{neural_network_forward.1}
  #allocation0 [shape = 'u32[]', space=smem, size = 0x4, offset = 0x4, fixed_abs, tag = 'smem constant byte address 0x4 - core index']
  #allocation1 [shape = 'u32[144,128]{1,0:T(1,128)}', space=vmem, size = 0x12000, scoped, tag = 'internal scratch']
  %s0 = inlined_call_operand.vmem [shape: f32[8,784], index: 0, kind: input, shape index: {}]
  %s1 = inlined_call_operand.hbm [shape: bf16[784,512], index: 1, kind: input, shape index: {}]
  %s2 = inlined_call_operand.vmem [shape: f32[1,512], index: 2, kind: input, shape index: {}]
  %s3 = inlined_call_operand.hbm [shape: bf16[512,512], index: 3, kind: input, shape index: {}]
  %s4 = inlined_call_operand.vmem [shape: f32[1,512], index: 4, kind: input, shape index: {}]
  %s5 = inlined_call_operand.vmem [shape: bf16[512,128], index: 5, kind: input, shape index: {}]
  %s6 = inlined_call_operand.vmem [shape: f32[1,128], index: 6, kind: input, shape index: {}]
  %s7 = inlined_call_operand.hbm [shape: f32[8,128], index: 7, kind: output, shape index: {}]
  %s8 = sld [smem:[#allocation0]]
  $region46: #{neural_network_forward.1} parent=0
    _
  %s10 = ssub.s32 1, %s8
  %s11 = scalar_select 0, %s10, %s8
  $region1: #{neural_network_forward.1} parent=0
    #allocation2 [shape = 'u8[802816]{0}', space=vmem, size = 0xc4000, scoped, tag = 'input window, operand 1, single buffered']
    #allocation3 [shape = 's32[1]{0}', space=sflag, size = 0x4, scoped, tag = 'scoped memory for neural_network_forward.1']
    #allocation4 [shape = 's32[1]{0}', space=sflag, size = 0x4, scoped, tag = 'scoped memory for neural_network_forward.1']
    #allocation5 [shape = 'u8[524288]{0}', space=vmem, size = 0x80000, scoped, tag = 'input window, operand 3, single buffered']
    #allocation6 [shape = 's32[1]{0}', space=sflag, size = 0x4, scoped, tag = 'scoped memory for neural_network_forward.1']
    #allocation7 [shape = 'u8[4096]{0}', space=vmem, size = 0x1000, scoped, tag = 'output window, operand 0, single buffered']
    %12 = vsyncpa [#allocation3], 0
    %13 = vsyncpa [#allocation6], 0
    %14 = vsyncpa [#allocation4], 0
    // Predicated region
    $region2: #{neural_network_forward.1} parent=1 // pred_check
      _
    $region3: #{neural_network_forward.1} parent=1 // pred_check_branch
      %16 = sbr.rel (0) target = $region5
    $region4: #{neural_network_forward.1} parent=1 // pred_region
      _
    $region5: #{neural_network_forward.1} parent=1 // pred_fallthru
      _
    // Predicated region
    $region6: #{neural_network_forward.1} parent=1 // pred_check
      _
    $region7: #{neural_network_forward.1} parent=1 // pred_check_branch
      %18 = sbr.rel (0) target = $region9
    $region8: #{neural_network_forward.1} parent=1 // pred_region
      %s20 = ssub.s32 25088, 25088
      %21 = vsyncadd [#allocation3], %s20
      %s22 = sshll.u32 [#allocation2], 4
      %s23 = int_to_ptr.vmem [resolvable:$true] %s22
      %28 = dma.hbm_to_vmem [thread:$0]  %s1, 25088, %s23, [#allocation3], 256, 256, 16
    $region9: #{neural_network_forward.1} parent=1 // pred_fallthru
      _
    // Predicated region
    $region10: #{neural_network_forward.1} parent=1 // pred_check
      _
    $region11: #{neural_network_forward.1} parent=1 // pred_check_branch
      %30 = sbr.rel (0) target = $region13
    $region12: #{neural_network_forward.1} parent=1 // pred_region
      _
    $region13: #{neural_network_forward.1} parent=1 // pred_fallthru
      _
    // Predicated region
    $region14: #{neural_network_forward.1} parent=1 // pred_check
      _
    $region15: #{neural_network_forward.1} parent=1 // pred_check_branch
      %32 = sbr.rel (0) target = $region17
    $region16: #{neural_network_forward.1} parent=1 // pred_region
      %s34 = ssub.s32 16384, 16384
      %35 = vsyncadd [#allocation6], %s34
      %s36 = sshll.u32 [#allocation5], 4
      %s37 = int_to_ptr.vmem [resolvable:$true] %s36
      %42 = dma.hbm_to_vmem [thread:$0]  %s3, 16384, %s37, [#allocation6], 256, 256, 16
    $region17: #{neural_network_forward.1} parent=1 // pred_fallthru
      _
    // Predicated region
    $region18: #{neural_network_forward.1} parent=1 // pred_check
      _
    $region19: #{neural_network_forward.1} parent=1 // pred_check_branch
      %44 = sbr.rel (0) target = $region21
    $region20: #{neural_network_forward.1} parent=1 // pred_region
      _
    $region21: #{neural_network_forward.1} parent=1 // pred_fallthru
      _
    // Predicated region
    $region22: #{neural_network_forward.1} parent=1 // pred_check
      _
    $region23: #{neural_network_forward.1} parent=1 // pred_check_branch
      %46 = sbr.rel (0) target = $region25
    $region24: #{neural_network_forward.1} parent=1 // pred_region
      _
    $region25: #{neural_network_forward.1} parent=1 // pred_fallthru
      _
    // Predicated region
    $region26: #{neural_network_forward.1} parent=1 // pred_check
      _
    $region27: #{neural_network_forward.1} parent=1 // pred_check_branch
      %48 = sbr.rel (0) target = $region29
    $region28: #{neural_network_forward.1} parent=1 // pred_region
      _
    $region29: #{neural_network_forward.1} parent=1 // pred_fallthru
      _
    // Predicated region
    $region30: #{neural_network_forward.1} parent=1 // pred_check
      _
    $region31: #{neural_network_forward.1} parent=1 // pred_check_branch
      %50 = sbr.rel (0) target = $region33
    $region32: #{neural_network_forward.1} parent=1 // pred_region
      %51 = dma.done [#allocation3], 25088
    $region33: #{neural_network_forward.1} parent=1 // pred_fallthru
      _
    // Predicated region
    $region34: #{neural_network_forward.1} parent=1 // pred_check
      _
    $region35: #{neural_network_forward.1} parent=1 // pred_check_branch
      %53 = sbr.rel (0) target = $region37
    $region36: #{neural_network_forward.1} parent=1 // pred_region
      %54 = dma.done [#allocation6], 16384
    $region37: #{neural_network_forward.1} parent=1 // pred_fallthru
      _
    %v56 = vld [vmem:[%s0] sm:$0xff]
    %v57 = vld [vmem:[%s0 + $0x8] sm:$0xff]
    %v58 = vld [vmem:[%s0 + $0x10] sm:$0xff]
    %v59 = vld [vmem:[%s0 + $0x18] sm:$0xff]
    %v60 = vld [vmem:[%s0 + $0x20] sm:$0xff]
    %v61 = vld [vmem:[%s0 + $0x28] sm:$0xff]
    %v62 = vld [vmem:[%s0 + $0x30] sm:$0xff]
    %v63 = vpack.c.bf16 %v56, %v56
    %v64 = vpack.c.bf16 %v57, %v57
    %v65 = vpack.c.bf16 %v58, %v58
    %v66 = vpack.c.bf16 %v59, %v59
    %v67 = vpack.c.bf16 %v60, %v60
    %v68 = vpack.c.bf16 %v61, %v61
    %v69 = vpack.c.bf16 %v62, %v62
    %v70 = vld [vmem:[#allocation2] sm:$0xff]
    %v71 = vld [vmem:[#allocation2 + $0x8] sm:$0xff]
    %v72 = vld [vmem:[#allocation2 + $0x10] sm:$0xff]
    %v73 = vld [vmem:[#allocation2 + $0x18] sm:$0xff]
    %v74 = vld [vmem:[#allocation2 + $0x20] sm:$0xff]
    %v75 = vld [vmem:[#allocation2 + $0x28] sm:$0xff]
    %v76 = vld [vmem:[#allocation2 + $0x30] sm:$0xff]
    %v77 = vld [vmem:[#allocation2 + $0x38] sm:$0xff]
    %v78 = vld [vmem:[#allocation2 + $0x40] sm:$0xff]
    %v79 = vld [vmem:[#allocation2 + $0x48] sm:$0xff]
    %v80 = vld [vmem:[#allocation2 + $0x50] sm:$0xff]
    %v81 = vld [vmem:[#allocation2 + $0x58] sm:$0xff]
    %v82 = vld [vmem:[#allocation2 + $0x60] sm:$0xff]
    %v83 = vld [vmem:[#allocation2 + $0x68] sm:$0xff]
    %v84 = vld [vmem:[#allocation2 + $0x70] sm:$0xff]
    %v85 = vld [vmem:[#allocation2 + $0x78] sm:$0xff]
    %v86 = vld [vmem:[#allocation2 + $0x80] sm:$0xff]
    %v87 = vld [vmem:[#allocation2 + $0x88] sm:$0xff]
    %v88 = vld [vmem:[#allocation2 + $0x90] sm:$0xff]
    %v89 = vld [vmem:[#allocation2 + $0x98] sm:$0xff]
    %v90 = vld [vmem:[#allocation2 + $0xa0] sm:$0xff]
    %v91 = vld [vmem:[#allocation2 + $0xa8] sm:$0xff]
    %v92 = vld [vmem:[#allocation2 + $0xb0] sm:$0xff]
    %v93 = vld [vmem:[#allocation2 + $0xb8] sm:$0xff]
    %v94 = vld [vmem:[#allocation2 + $0xc0] sm:$0xff]
    %v95 = vld [vmem:[#allocation2 + $0xc8] sm:$0xff]
    %v96 = vld [vmem:[#allocation2 + $0xd0] sm:$0xff]
    %v97 = vld [vmem:[#allocation2 + $0xd8] sm:$0xff]
    %v98 = vld [vmem:[#allocation2 + $0xe0] sm:$0xff]
    %v99 = vld [vmem:[#allocation2 + $0xe8] sm:$0xff]
    %v100 = vld [vmem:[#allocation2 + $0xf0] sm:$0xff]
    %v101 = vld [vmem:[#allocation2 + $0xf8] sm:$0xff]
    %v102 = vld [vmem:[#allocation2 + $0x100] sm:$0xff]
    %v103 = vld [vmem:[#allocation2 + $0x108] sm:$0xff]
    %v104 = vld [vmem:[#allocation2 + $0x110] sm:$0xff]
    %v105 = vld [vmem:[#allocation2 + $0x118] sm:$0xff]
    %v106 = vld [vmem:[#allocation2 + $0x120] sm:$0xff]
    %v107 = vld [vmem:[#allocation2 + $0x128] sm:$0xff]
    %v108 = vld [vmem:[#allocation2 + $0x130] sm:$0xff]
    %v109 = vld [vmem:[#allocation2 + $0x138] sm:$0xff]
    %v110 = vld [vmem:[#allocation2 + $0x140] sm:$0xff]
    %v111 = vld [vmem:[#allocation2 + $0x148] sm:$0xff]
    %v112 = vld [vmem:[#allocation2 + $0x150] sm:$0xff]
    %v113 = vld [vmem:[#allocation2 + $0x158] sm:$0xff]
    %v114 = vld [vmem:[#allocation2 + $0x160] sm:$0xff]
    %v115 = vld [vmem:[#allocation2 + $0x168] sm:$0xff]
    %v116 = vld [vmem:[#allocation2 + $0x170] sm:$0xff]
    %v117 = vld [vmem:[#allocation2 + $0x178] sm:$0xff]
    %v118 = vld [vmem:[#allocation2 + $0x180] sm:$0xff]
    %v119 = vld [vmem:[#allocation2 + $0x188] sm:$0xff]
    %v120 = vld [vmem:[#allocation2 + $0x190] sm:$0xff]
    %v121 = vld [vmem:[#allocation2 + $0x198] sm:$0xff]
    %v122 = vld [vmem:[#allocation2 + $0x1a0] sm:$0xff]
    %v123 = vld [vmem:[#allocation2 + $0x1a8] sm:$0xff]
    %v124 = vld [vmem:[#allocation2 + $0x1b0] sm:$0xff]
    %v125 = vld [vmem:[#allocation2 + $0x1b8] sm:$0xff]
    %v126 = vld [vmem:[#allocation2 + $0x1c0] sm:$0xff]
    %v127 = vld [vmem:[#allocation2 + $0x1c8] sm:$0xff]
    %v128 = vld [vmem:[#allocation2 + $0x1d0] sm:$0xff]
    %v129 = vld [vmem:[#allocation2 + $0x1d8] sm:$0xff]
    %v130 = vld [vmem:[#allocation2 + $0x1e0] sm:$0xff]
    %v131 = vld [vmem:[#allocation2 + $0x1e8] sm:$0xff]
    %v132 = vld [vmem:[#allocation2 + $0x1f0] sm:$0xff]
    %v133 = vld [vmem:[#allocation2 + $0x1f8] sm:$0xff]
    %v134 = vld [vmem:[#allocation2 + $0x200] sm:$0xff]
    %v135 = vld [vmem:[#allocation2 + $0x208] sm:$0xff]
    %v136 = vld [vmem:[#allocation2 + $0x210] sm:$0xff]
    %v137 = vld [vmem:[#allocation2 + $0x218] sm:$0xff]
    %v138 = vld [vmem:[#allocation2 + $0x220] sm:$0xff]
    %v139 = vld [vmem:[#allocation2 + $0x228] sm:$0xff]
    %v140 = vld [vmem:[#allocation2 + $0x230] sm:$0xff]
    %v141 = vld [vmem:[#allocation2 + $0x238] sm:$0xff]
    %v142 = vld [vmem:[#allocation2 + $0x240] sm:$0xff]
    %v143 = vld [vmem:[#allocation2 + $0x248] sm:$0xff]
    %v144 = vld [vmem:[#allocation2 + $0x250] sm:$0xff]
    %v145 = vld [vmem:[#allocation2 + $0x258] sm:$0xff]
    %v146 = vld [vmem:[#allocation2 + $0x260] sm:$0xff]
    %v147 = vld [vmem:[#allocation2 + $0x268] sm:$0xff]
    %v148 = vld [vmem:[#allocation2 + $0x270] sm:$0xff]
    %v149 = vld [vmem:[#allocation2 + $0x278] sm:$0xff]
    %v150 = vld [vmem:[#allocation2 + $0x280] sm:$0xff]
    %v151 = vld [vmem:[#allocation2 + $0x288] sm:$0xff]
    %v152 = vld [vmem:[#allocation2 + $0x290] sm:$0xff]
    %v153 = vld [vmem:[#allocation2 + $0x298] sm:$0xff]
    %v154 = vld [vmem:[#allocation2 + $0x2a0] sm:$0xff]
    %v155 = vld [vmem:[#allocation2 + $0x2a8] sm:$0xff]
    %v156 = vld [vmem:[#allocation2 + $0x2b0] sm:$0xff]
    %v157 = vld [vmem:[#allocation2 + $0x2b8] sm:$0xff]
    %v158 = vld [vmem:[#allocation2 + $0x2c0] sm:$0xff]
    %v159 = vld [vmem:[#allocation2 + $0x2c8] sm:$0xff]
    %v160 = vld [vmem:[#allocation2 + $0x2d0] sm:$0xff]
    %v161 = vld [vmem:[#allocation2 + $0x2d8] sm:$0xff]
    %v162 = vld [vmem:[#allocation2 + $0x2e0] sm:$0xff]
    %v163 = vld [vmem:[#allocation2 + $0x2e8] sm:$0xff]
    %v164 = vld [vmem:[#allocation2 + $0x2f0] sm:$0xff]
    %v165 = vld [vmem:[#allocation2 + $0x2f8] sm:$0xff]
    %v166 = vld [vmem:[#allocation2 + $0x300] sm:$0xff]
    %v167 = vld [vmem:[#allocation2 + $0x308] sm:$0xff]
    %v168 = vld [vmem:[#allocation2 + $0x310] sm:$0xff]
    %v169 = vld [vmem:[#allocation2 + $0x318] sm:$0xff]
    %v170 = vld [vmem:[#allocation2 + $0x320] sm:$0xff]
    %v171 = vld [vmem:[#allocation2 + $0x328] sm:$0xff]
    %v172 = vld [vmem:[#allocation2 + $0x330] sm:$0xff]
    %v173 = vld [vmem:[#allocation2 + $0x338] sm:$0xff]
    %v174 = vld [vmem:[#allocation2 + $0x340] sm:$0xff]
    %v175 = vld [vmem:[#allocation2 + $0x348] sm:$0xff]
    %v176 = vld [vmem:[#allocation2 + $0x350] sm:$0xff]
    %v177 = vld [vmem:[#allocation2 + $0x358] sm:$0xff]
    %v178 = vld [vmem:[#allocation2 + $0x360] sm:$0xff]
    %v179 = vld [vmem:[#allocation2 + $0x368] sm:$0xff]
    %v180 = vld [vmem:[#allocation2 + $0x370] sm:$0xff]
    %v181 = vld [vmem:[#allocation2 + $0x378] sm:$0xff]
    %v182 = vld [vmem:[#allocation2 + $0x380] sm:$0xff]
    %v183 = vld [vmem:[#allocation2 + $0x388] sm:$0xff]
    %v184 = vld [vmem:[#allocation2 + $0x390] sm:$0xff]
    %v185 = vld [vmem:[#allocation2 + $0x398] sm:$0xff]
    %v186 = vld [vmem:[#allocation2 + $0x3a0] sm:$0xff]
    %v187 = vld [vmem:[#allocation2 + $0x3a8] sm:$0xff]
    %v188 = vld [vmem:[#allocation2 + $0x3b0] sm:$0xff]
    %v189 = vld [vmem:[#allocation2 + $0x3b8] sm:$0xff]
    %v190 = vld [vmem:[#allocation2 + $0x3c0] sm:$0xff]
    %v191 = vld [vmem:[#allocation2 + $0x3c8] sm:$0xff]
    %v192 = vld [vmem:[#allocation2 + $0x3d0] sm:$0xff]
    %v193 = vld [vmem:[#allocation2 + $0x3d8] sm:$0xff]
    %v194 = vld [vmem:[#allocation2 + $0x3e0] sm:$0xff]
    %v195 = vld [vmem:[#allocation2 + $0x3e8] sm:$0xff]
    %v196 = vld [vmem:[#allocation2 + $0x3f0] sm:$0xff]
    %v197 = vld [vmem:[#allocation2 + $0x3f8] sm:$0xff]
    %v198 = vld [vmem:[#allocation2 + $0x400] sm:$0xff]
    %v199 = vld [vmem:[#allocation2 + $0x408] sm:$0xff]
    %v200 = vld [vmem:[#allocation2 + $0x410] sm:$0xff]
    %v201 = vld [vmem:[#allocation2 + $0x418] sm:$0xff]
    %v202 = vld [vmem:[#allocation2 + $0x420] sm:$0xff]
    %v203 = vld [vmem:[#allocation2 + $0x428] sm:$0xff]
    %v204 = vld [vmem:[#allocation2 + $0x430] sm:$0xff]
    %v205 = vld [vmem:[#allocation2 + $0x438] sm:$0xff]
    %v206 = vld [vmem:[#allocation2 + $0x440] sm:$0xff]
    %v207 = vld [vmem:[#allocation2 + $0x448] sm:$0xff]
    %v208 = vld [vmem:[#allocation2 + $0x450] sm:$0xff]
    %v209 = vld [vmem:[#allocation2 + $0x458] sm:$0xff]
    %v210 = vld [vmem:[#allocation2 + $0x460] sm:$0xff]
    %v211 = vld [vmem:[#allocation2 + $0x468] sm:$0xff]
    %v212 = vld [vmem:[#allocation2 + $0x470] sm:$0xff]
    %v213 = vld [vmem:[#allocation2 + $0x478] sm:$0xff]
    %v214 = vld [vmem:[#allocation2 + $0x480] sm:$0xff]
    %v215 = vld [vmem:[#allocation2 + $0x488] sm:$0xff]
    %v216 = vld [vmem:[#allocation2 + $0x490] sm:$0xff]
    %v217 = vld [vmem:[#allocation2 + $0x498] sm:$0xff]
    %v218 = vld [vmem:[#allocation2 + $0x4a0] sm:$0xff]
    %v219 = vld [vmem:[#allocation2 + $0x4a8] sm:$0xff]
    %v220 = vld [vmem:[#allocation2 + $0x4b0] sm:$0xff]
    %v221 = vld [vmem:[#allocation2 + $0x4b8] sm:$0xff]
    %v222 = vld [vmem:[#allocation2 + $0x4c0] sm:$0xff]
    %v223 = vld [vmem:[#allocation2 + $0x4c8] sm:$0xff]
    %v224 = vld [vmem:[#allocation2 + $0x4d0] sm:$0xff]
    %v225 = vld [vmem:[#allocation2 + $0x4d8] sm:$0xff]
    %v226 = vld [vmem:[#allocation2 + $0x4e0] sm:$0xff]
    %v227 = vld [vmem:[#allocation2 + $0x4e8] sm:$0xff]
    %v228 = vld [vmem:[#allocation2 + $0x4f0] sm:$0xff]
    %v229 = vld [vmem:[#allocation2 + $0x4f8] sm:$0xff]
    %v230 = vld [vmem:[#allocation2 + $0x500] sm:$0xff]
    %v231 = vld [vmem:[#allocation2 + $0x508] sm:$0xff]
    %v232 = vld [vmem:[#allocation2 + $0x510] sm:$0xff]
    %v233 = vld [vmem:[#allocation2 + $0x518] sm:$0xff]
    %v234 = vld [vmem:[#allocation2 + $0x520] sm:$0xff]
    %v235 = vld [vmem:[#allocation2 + $0x528] sm:$0xff]
    %v236 = vld [vmem:[#allocation2 + $0x530] sm:$0xff]
    %v237 = vld [vmem:[#allocation2 + $0x538] sm:$0xff]
    %v238 = vld [vmem:[#allocation2 + $0x540] sm:$0xff]
    %v239 = vld [vmem:[#allocation2 + $0x548] sm:$0xff]
    %v240 = vld [vmem:[#allocation2 + $0x550] sm:$0xff]
    %v241 = vld [vmem:[#allocation2 + $0x558] sm:$0xff]
    %v242 = vld [vmem:[#allocation2 + $0x560] sm:$0xff]
    %v243 = vld [vmem:[#allocation2 + $0x568] sm:$0xff]
    %v244 = vld [vmem:[#allocation2 + $0x570] sm:$0xff]
    %v245 = vld [vmem:[#allocation2 + $0x578] sm:$0xff]
    %v246 = vld [vmem:[#allocation2 + $0x580] sm:$0xff]
    %v247 = vld [vmem:[#allocation2 + $0x588] sm:$0xff]
    %v248 = vld [vmem:[#allocation2 + $0x590] sm:$0xff]
    %v249 = vld [vmem:[#allocation2 + $0x598] sm:$0xff]
    %v250 = vld [vmem:[#allocation2 + $0x5a0] sm:$0xff]
    %v251 = vld [vmem:[#allocation2 + $0x5a8] sm:$0xff]
    %v252 = vld [vmem:[#allocation2 + $0x5b0] sm:$0xff]
    %v253 = vld [vmem:[#allocation2 + $0x5b8] sm:$0xff]
    %v254 = vld [vmem:[#allocation2 + $0x5c0] sm:$0xff]
    %v255 = vld [vmem:[#allocation2 + $0x5c8] sm:$0xff]
    %v256 = vld [vmem:[#allocation2 + $0x5d0] sm:$0xff]
    %v257 = vld [vmem:[#allocation2 + $0x5d8] sm:$0xff]
    %v258 = vld [vmem:[#allocation2 + $0x5e0] sm:$0xff]
    %v259 = vld [vmem:[#allocation2 + $0x5e8] sm:$0xff]
    %v260 = vld [vmem:[#allocation2 + $0x5f0] sm:$0xff]
    %v261 = vld [vmem:[#allocation2 + $0x5f8] sm:$0xff]
    %v262 = vld [vmem:[#allocation2 + $0x600] sm:$0xff]
    %v263 = vld [vmem:[#allocation2 + $0x608] sm:$0xff]
    %v264 = vld [vmem:[#allocation2 + $0x610] sm:$0xff]
    %v265 = vld [vmem:[#allocation2 + $0x618] sm:$0xff]
    %v266 = vld [vmem:[%s2] sm:$0xf]
    %v268 = vlaneseq
    %v269 = vshrl.u32 %v268, 7
    %v270 = vsub.s32 0, %v269
    %v271 = vrot.slane %v266, %v270
    %v272 = vlaneseq
    %v273 = vshrl.u32 %v272, 7
    %v274 = vsub.s32 1, %v273
    %v275 = vrot.slane %v266, %v274
    %v276 = vlaneseq
    %v277 = vshrl.u32 %v276, 7
    %v278 = vsub.s32 2, %v277
    %v279 = vrot.slane %v266, %v278
    %v280 = vlaneseq
    %v281 = vshrl.u32 %v280, 7
    %v282 = vsub.s32 3, %v281
    %v283 = vrot.slane %v266, %v282
    %v484 = vunpack.c.l.b16 %v70
    %v485 = vunpack.c.h.b16 %v70
    %v486 = vunpack.c.l.b16 %v71
    %v487 = vunpack.c.h.b16 %v71
    %v488 = vunpack.c.l.b16 %v72
    %v489 = vunpack.c.h.b16 %v72
    %v490 = vunpack.c.l.b16 %v73
    %v491 = vunpack.c.h.b16 %v73
    %v492 = vunpack.c.l.b16 %v74
    %v493 = vunpack.c.h.b16 %v74
    %v494 = vunpack.c.l.b16 %v75
    %v495 = vunpack.c.h.b16 %v75
    %v496 = vunpack.c.l.b16 %v76
    %v497 = vunpack.c.h.b16 %v76
    %v498 = vunpack.c.l.b16 %v77
    %v499 = vunpack.c.h.b16 %v77
    %v500 = vunpack.c.l.b16 %v78
    %v501 = vunpack.c.h.b16 %v78
    %v502 = vunpack.c.l.b16 %v79
    %v503 = vunpack.c.h.b16 %v79
    %v504 = vunpack.c.l.b16 %v80
    %v505 = vunpack.c.h.b16 %v80
    %v506 = vunpack.c.l.b16 %v81
    %v507 = vunpack.c.h.b16 %v81
    %v508 = vunpack.c.l.b16 %v82
    %v509 = vunpack.c.h.b16 %v82
    %v510 = vunpack.c.l.b16 %v83
    %v511 = vunpack.c.h.b16 %v83
    %v512 = vunpack.c.l.b16 %v84
    %v513 = vunpack.c.h.b16 %v84
    %v514 = vunpack.c.l.b16 %v85
    %v515 = vunpack.c.h.b16 %v85
    %v516 = vunpack.c.l.b16 %v86
    %v517 = vunpack.c.h.b16 %v86
    %v518 = vunpack.c.l.b16 %v87
    %v519 = vunpack.c.h.b16 %v87
    %v520 = vunpack.c.l.b16 %v88
    %v521 = vunpack.c.h.b16 %v88
    %v522 = vunpack.c.l.b16 %v89
    %v523 = vunpack.c.h.b16 %v89
    %v524 = vunpack.c.l.b16 %v90
    %v525 = vunpack.c.h.b16 %v90
    %v526 = vunpack.c.l.b16 %v91
    %v527 = vunpack.c.h.b16 %v91
    %v528 = vunpack.c.l.b16 %v92
    %v529 = vunpack.c.h.b16 %v92
    %v530 = vunpack.c.l.b16 %v93
    %v531 = vunpack.c.h.b16 %v93
    %v532 = vunpack.c.l.b16 %v94
    %v533 = vunpack.c.h.b16 %v94
    %v534 = vunpack.c.l.b16 %v95
    %v535 = vunpack.c.h.b16 %v95
    %v536 = vunpack.c.l.b16 %v96
    %v537 = vunpack.c.h.b16 %v96
    %v538 = vunpack.c.l.b16 %v97
    %v539 = vunpack.c.h.b16 %v97
    %v540 = vunpack.c.l.b16 %v98
    %v541 = vunpack.c.h.b16 %v98
    %v542 = vunpack.c.l.b16 %v99
    %v543 = vunpack.c.h.b16 %v99
    %v544 = vunpack.c.l.b16 %v100
    %v545 = vunpack.c.h.b16 %v100
    %v546 = vunpack.c.l.b16 %v101
    %v547 = vunpack.c.h.b16 %v101
    %v548 = vunpack.c.l.b16 %v102
    %v549 = vunpack.c.h.b16 %v102
    %v550 = vunpack.c.l.b16 %v103
    %v551 = vunpack.c.h.b16 %v103
    %v552 = vunpack.c.l.b16 %v104
    %v553 = vunpack.c.h.b16 %v104
    %v554 = vunpack.c.l.b16 %v105
    %v555 = vunpack.c.h.b16 %v105
    %v556 = vunpack.c.l.b16 %v106
    %v557 = vunpack.c.h.b16 %v106
    %v558 = vunpack.c.l.b16 %v107
    %v559 = vunpack.c.h.b16 %v107
    %v560 = vunpack.c.l.b16 %v108
    %v561 = vunpack.c.h.b16 %v108
    %v562 = vunpack.c.l.b16 %v109
    %v563 = vunpack.c.h.b16 %v109
    %v564 = vunpack.c.l.b16 %v110
    %v565 = vunpack.c.h.b16 %v110
    %v566 = vunpack.c.l.b16 %v111
    %v567 = vunpack.c.h.b16 %v111
    %v568 = vunpack.c.l.b16 %v112
    %v569 = vunpack.c.h.b16 %v112
    %v570 = vunpack.c.l.b16 %v113
    %v571 = vunpack.c.h.b16 %v113
    %v572 = vunpack.c.l.b16 %v114
    %v573 = vunpack.c.h.b16 %v114
    %v574 = vunpack.c.l.b16 %v115
    %v575 = vunpack.c.h.b16 %v115
    %v576 = vunpack.c.l.b16 %v116
    %v577 = vunpack.c.h.b16 %v116
    %v578 = vunpack.c.l.b16 %v117
    %v579 = vunpack.c.h.b16 %v117
    %v580 = vunpack.c.l.b16 %v118
    %v581 = vunpack.c.h.b16 %v118
    %v582 = vunpack.c.l.b16 %v119
    %v583 = vunpack.c.h.b16 %v119
    %v584 = vunpack.c.l.b16 %v120
    %v585 = vunpack.c.h.b16 %v120
    %v586 = vunpack.c.l.b16 %v121
    %v587 = vunpack.c.h.b16 %v121
    %v588 = vunpack.c.l.b16 %v122
    %v589 = vunpack.c.h.b16 %v122
    %v590 = vunpack.c.l.b16 %v123
    %v591 = vunpack.c.h.b16 %v123
    %v592 = vunpack.c.l.b16 %v124
    %v593 = vunpack.c.h.b16 %v124
    %v594 = vunpack.c.l.b16 %v125
    %v595 = vunpack.c.h.b16 %v125
    %v596 = vunpack.c.l.b16 %v126
    %v597 = vunpack.c.h.b16 %v126
    %v598 = vunpack.c.l.b16 %v127
    %v599 = vunpack.c.h.b16 %v127
    %v600 = vunpack.c.l.b16 %v128
    %v601 = vunpack.c.h.b16 %v128
    %v602 = vunpack.c.l.b16 %v129
    %v603 = vunpack.c.h.b16 %v129
    %v604 = vunpack.c.l.b16 %v130
    %v605 = vunpack.c.h.b16 %v130
    %v606 = vunpack.c.l.b16 %v131
    %v607 = vunpack.c.h.b16 %v131
    %v608 = vunpack.c.l.b16 %v132
    %v609 = vunpack.c.h.b16 %v132
    %v610 = vunpack.c.l.b16 %v133
    %v611 = vunpack.c.h.b16 %v133
    %v612 = vunpack.c.l.b16 %v134
    %v613 = vunpack.c.h.b16 %v134
    %v614 = vunpack.c.l.b16 %v135
    %v615 = vunpack.c.h.b16 %v135
    %v616 = vunpack.c.l.b16 %v136
    %v617 = vunpack.c.h.b16 %v136
    %v618 = vunpack.c.l.b16 %v137
    %v619 = vunpack.c.h.b16 %v137
    %v620 = vunpack.c.l.b16 %v138
    %v621 = vunpack.c.h.b16 %v138
    %v622 = vunpack.c.l.b16 %v139
    %v623 = vunpack.c.h.b16 %v139
    %v624 = vunpack.c.l.b16 %v140
    %v625 = vunpack.c.h.b16 %v140
    %v626 = vunpack.c.l.b16 %v141
    %v627 = vunpack.c.h.b16 %v141
    %v628 = vunpack.c.l.b16 %v142
    %v629 = vunpack.c.h.b16 %v142
    %v630 = vunpack.c.l.b16 %v143
    %v631 = vunpack.c.h.b16 %v143
    %v632 = vunpack.c.l.b16 %v144
    %v633 = vunpack.c.h.b16 %v144
    %v634 = vunpack.c.l.b16 %v145
    %v635 = vunpack.c.h.b16 %v145
    %v636 = vunpack.c.l.b16 %v146
    %v637 = vunpack.c.h.b16 %v146
    %v638 = vunpack.c.l.b16 %v147
    %v639 = vunpack.c.h.b16 %v147
    %v640 = vunpack.c.l.b16 %v148
    %v641 = vunpack.c.h.b16 %v148
    %v642 = vunpack.c.l.b16 %v149
    %v643 = vunpack.c.h.b16 %v149
    %v644 = vunpack.c.l.b16 %v150
    %v645 = vunpack.c.h.b16 %v150
    %v646 = vunpack.c.l.b16 %v151
    %v647 = vunpack.c.h.b16 %v151
    %v648 = vunpack.c.l.b16 %v152
    %v649 = vunpack.c.h.b16 %v152
    %v650 = vunpack.c.l.b16 %v153
    %v651 = vunpack.c.h.b16 %v153
    %v652 = vunpack.c.l.b16 %v154
    %v653 = vunpack.c.h.b16 %v154
    %v654 = vunpack.c.l.b16 %v155
    %v655 = vunpack.c.h.b16 %v155
    %v656 = vunpack.c.l.b16 %v156
    %v657 = vunpack.c.h.b16 %v156
    %v658 = vunpack.c.l.b16 %v157
    %v659 = vunpack.c.h.b16 %v157
    %v660 = vunpack.c.l.b16 %v158
    %v661 = vunpack.c.h.b16 %v158
    %v662 = vunpack.c.l.b16 %v159
    %v663 = vunpack.c.h.b16 %v159
    %v664 = vunpack.c.l.b16 %v160
    %v665 = vunpack.c.h.b16 %v160
    %v666 = vunpack.c.l.b16 %v161
    %v667 = vunpack.c.h.b16 %v161
    %v668 = vunpack.c.l.b16 %v162
    %v669 = vunpack.c.h.b16 %v162
    %v670 = vunpack.c.l.b16 %v163
    %v671 = vunpack.c.h.b16 %v163
    %v672 = vunpack.c.l.b16 %v164
    %v673 = vunpack.c.h.b16 %v164
    %v674 = vunpack.c.l.b16 %v165
    %v675 = vunpack.c.h.b16 %v165
    %v676 = vunpack.c.l.b16 %v166
    %v677 = vunpack.c.h.b16 %v166
    %v678 = vunpack.c.l.b16 %v167
    %v679 = vunpack.c.h.b16 %v167
    %v680 = vunpack.c.l.b16 %v168
    %v681 = vunpack.c.h.b16 %v168
    %v682 = vunpack.c.l.b16 %v169
    %v683 = vunpack.c.h.b16 %v169
    %v684 = vunpack.c.l.b16 %v170
    %v685 = vunpack.c.h.b16 %v170
    %v686 = vunpack.c.l.b16 %v171
    %v687 = vunpack.c.h.b16 %v171
    %v688 = vunpack.c.l.b16 %v172
    %v689 = vunpack.c.h.b16 %v172
    %v690 = vunpack.c.l.b16 %v173
    %v691 = vunpack.c.h.b16 %v173
    %v692 = vunpack.c.l.b16 %v174
    %v693 = vunpack.c.h.b16 %v174
    %v694 = vunpack.c.l.b16 %v175
    %v695 = vunpack.c.h.b16 %v175
    %v696 = vunpack.c.l.b16 %v176
    %v697 = vunpack.c.h.b16 %v176
    %v698 = vunpack.c.l.b16 %v177
    %v699 = vunpack.c.h.b16 %v177
    %v700 = vunpack.c.l.b16 %v178
    %v701 = vunpack.c.h.b16 %v178
    %v702 = vunpack.c.l.b16 %v179
    %v703 = vunpack.c.h.b16 %v179
    %v704 = vunpack.c.l.b16 %v180
    %v705 = vunpack.c.h.b16 %v180
    %v706 = vunpack.c.l.b16 %v181
    %v707 = vunpack.c.h.b16 %v181
    %v708 = vunpack.c.l.b16 %v182
    %v709 = vunpack.c.h.b16 %v182
    %v710 = vunpack.c.l.b16 %v183
    %v711 = vunpack.c.h.b16 %v183
    %v712 = vunpack.c.l.b16 %v184
    %v713 = vunpack.c.h.b16 %v184
    %v714 = vunpack.c.l.b16 %v185
    %v715 = vunpack.c.h.b16 %v185
    %v716 = vunpack.c.l.b16 %v186
    %v717 = vunpack.c.h.b16 %v186
    %v718 = vunpack.c.l.b16 %v187
    %v719 = vunpack.c.h.b16 %v187
    %v720 = vunpack.c.l.b16 %v188
    %v721 = vunpack.c.h.b16 %v188
    %v722 = vunpack.c.l.b16 %v189
    %v723 = vunpack.c.h.b16 %v189
    %v724 = vunpack.c.l.b16 %v190
    %v725 = vunpack.c.h.b16 %v190
    %v726 = vunpack.c.l.b16 %v191
    %v727 = vunpack.c.h.b16 %v191
    %v728 = vunpack.c.l.b16 %v192
    %v729 = vunpack.c.h.b16 %v192
    %v730 = vunpack.c.l.b16 %v193
    %v731 = vunpack.c.h.b16 %v193
    %v732 = vunpack.c.l.b16 %v194
    %v733 = vunpack.c.h.b16 %v194
    %v734 = vunpack.c.l.b16 %v195
    %v735 = vunpack.c.h.b16 %v195
    %v736 = vunpack.c.l.b16 %v196
    %v737 = vunpack.c.h.b16 %v196
    %v738 = vunpack.c.l.b16 %v197
    %v739 = vunpack.c.h.b16 %v197
    %v740 = vunpack.c.l.b16 %v198
    %v741 = vunpack.c.h.b16 %v198
    %v742 = vunpack.c.l.b16 %v199
    %v743 = vunpack.c.h.b16 %v199
    %v744 = vunpack.c.l.b16 %v200
    %v745 = vunpack.c.h.b16 %v200
    %v746 = vunpack.c.l.b16 %v201
    %v747 = vunpack.c.h.b16 %v201
    %v748 = vunpack.c.l.b16 %v202
    %v749 = vunpack.c.h.b16 %v202
    %v750 = vunpack.c.l.b16 %v203
    %v751 = vunpack.c.h.b16 %v203
    %v752 = vunpack.c.l.b16 %v204
    %v753 = vunpack.c.h.b16 %v204
    %v754 = vunpack.c.l.b16 %v205
    %v755 = vunpack.c.h.b16 %v205
    %v756 = vunpack.c.l.b16 %v206
    %v757 = vunpack.c.h.b16 %v206
    %v758 = vunpack.c.l.b16 %v207
    %v759 = vunpack.c.h.b16 %v207
    %v760 = vunpack.c.l.b16 %v208
    %v761 = vunpack.c.h.b16 %v208
    %v762 = vunpack.c.l.b16 %v209
    %v763 = vunpack.c.h.b16 %v209
    %v764 = vunpack.c.l.b16 %v210
    %v765 = vunpack.c.h.b16 %v210
    %v766 = vunpack.c.l.b16 %v211
    %v767 = vunpack.c.h.b16 %v211
    %v768 = vunpack.c.l.b16 %v212
    %v769 = vunpack.c.h.b16 %v212
    %v770 = vunpack.c.l.b16 %v213
    %v771 = vunpack.c.h.b16 %v213
    %v772 = vunpack.c.l.b16 %v214
    %v773 = vunpack.c.h.b16 %v214
    %v774 = vunpack.c.l.b16 %v215
    %v775 = vunpack.c.h.b16 %v215
    %v776 = vunpack.c.l.b16 %v216
    %v777 = vunpack.c.h.b16 %v216
    %v778 = vunpack.c.l.b16 %v217
    %v779 = vunpack.c.h.b16 %v217
    %v780 = vunpack.c.l.b16 %v218
    %v781 = vunpack.c.h.b16 %v218
    %v782 = vunpack.c.l.b16 %v219
    %v783 = vunpack.c.h.b16 %v219
    %v784 = vunpack.c.l.b16 %v220
    %v785 = vunpack.c.h.b16 %v220
    %v786 = vunpack.c.l.b16 %v221
    %v787 = vunpack.c.h.b16 %v221
    %v788 = vunpack.c.l.b16 %v222
    %v789 = vunpack.c.h.b16 %v222
    %v790 = vunpack.c.l.b16 %v223
    %v791 = vunpack.c.h.b16 %v223
    %v792 = vunpack.c.l.b16 %v224
    %v793 = vunpack.c.h.b16 %v224
    %v794 = vunpack.c.l.b16 %v225
    %v795 = vunpack.c.h.b16 %v225
    %v796 = vunpack.c.l.b16 %v226
    %v797 = vunpack.c.h.b16 %v226
    %v798 = vunpack.c.l.b16 %v227
    %v799 = vunpack.c.h.b16 %v227
    %v800 = vunpack.c.l.b16 %v228
    %v801 = vunpack.c.h.b16 %v228
    %v802 = vunpack.c.l.b16 %v229
    %v803 = vunpack.c.h.b16 %v229
    %v804 = vunpack.c.l.b16 %v230
    %v805 = vunpack.c.h.b16 %v230
    %v806 = vunpack.c.l.b16 %v231
    %v807 = vunpack.c.h.b16 %v231
    %v808 = vunpack.c.l.b16 %v232
    %v809 = vunpack.c.h.b16 %v232
    %v810 = vunpack.c.l.b16 %v233
    %v811 = vunpack.c.h.b16 %v233
    %v812 = vunpack.c.l.b16 %v234
    %v813 = vunpack.c.h.b16 %v234
    %v814 = vunpack.c.l.b16 %v235
    %v815 = vunpack.c.h.b16 %v235
    %v816 = vunpack.c.l.b16 %v236
    %v817 = vunpack.c.h.b16 %v236
    %v818 = vunpack.c.l.b16 %v237
    %v819 = vunpack.c.h.b16 %v237
    %v820 = vunpack.c.l.b16 %v238
    %v821 = vunpack.c.h.b16 %v238
    %v822 = vunpack.c.l.b16 %v239
    %v823 = vunpack.c.h.b16 %v239
    %v824 = vunpack.c.l.b16 %v240
    %v825 = vunpack.c.h.b16 %v240
    %v826 = vunpack.c.l.b16 %v241
    %v827 = vunpack.c.h.b16 %v241
    %v828 = vunpack.c.l.b16 %v242
    %v829 = vunpack.c.h.b16 %v242
    %v830 = vunpack.c.l.b16 %v243
    %v831 = vunpack.c.h.b16 %v243
    %v832 = vunpack.c.l.b16 %v244
    %v833 = vunpack.c.h.b16 %v244
    %v834 = vunpack.c.l.b16 %v245
    %v835 = vunpack.c.h.b16 %v245
    %v836 = vunpack.c.l.b16 %v246
    %v837 = vunpack.c.h.b16 %v246
    %v838 = vunpack.c.l.b16 %v247
    %v839 = vunpack.c.h.b16 %v247
    %v840 = vunpack.c.l.b16 %v248
    %v841 = vunpack.c.h.b16 %v248
    %v842 = vunpack.c.l.b16 %v249
    %v843 = vunpack.c.h.b16 %v249
    %v844 = vunpack.c.l.b16 %v250
    %v845 = vunpack.c.h.b16 %v250
    %v846 = vunpack.c.l.b16 %v251
    %v847 = vunpack.c.h.b16 %v251
    %v848 = vunpack.c.l.b16 %v252
    %v849 = vunpack.c.h.b16 %v252
    %v850 = vunpack.c.l.b16 %v253
    %v851 = vunpack.c.h.b16 %v253
    %v852 = vunpack.c.l.b16 %v254
    %v853 = vunpack.c.h.b16 %v254
    %v854 = vunpack.c.l.b16 %v255
    %v855 = vunpack.c.h.b16 %v255
    %v856 = vunpack.c.l.b16 %v256
    %v857 = vunpack.c.h.b16 %v256
    %v858 = vunpack.c.l.b16 %v257
    %v859 = vunpack.c.h.b16 %v257
    %v860 = vunpack.c.l.b16 %v258
    %v861 = vunpack.c.h.b16 %v258
    %v862 = vunpack.c.l.b16 %v259
    %v863 = vunpack.c.h.b16 %v259
    %v864 = vunpack.c.l.b16 %v260
    %v865 = vunpack.c.h.b16 %v260
    %v866 = vunpack.c.l.b16 %v261
    %v867 = vunpack.c.h.b16 %v261
    %v868 = vunpack.c.l.b16 %v262
    %v869 = vunpack.c.h.b16 %v262
    %v870 = vunpack.c.l.b16 %v263
    %v871 = vunpack.c.h.b16 %v263
    %v872 = vunpack.c.l.b16 %v264
    %v873 = vunpack.c.h.b16 %v264
    %v874 = vunpack.c.l.b16 %v265
    %v875 = vunpack.c.h.b16 %v265
    %v876 = vpack.c.b16 %v488, %v484
    %v877 = vpack.c.b16 %v489, %v485
    %v878 = vpack.c.b16 %v490, %v486
    %v879 = vpack.c.b16 %v491, %v487
    %v880 = vpack.c.b16 %v496, %v492
    %v881 = vpack.c.b16 %v497, %v493
    %v882 = vpack.c.b16 %v498, %v494
    %v883 = vpack.c.b16 %v499, %v495
    %v884 = vpack.c.b16 %v504, %v500
    %v885 = vpack.c.b16 %v505, %v501
    %v886 = vpack.c.b16 %v506, %v502
    %v887 = vpack.c.b16 %v507, %v503
    %v888 = vpack.c.b16 %v512, %v508
    %v889 = vpack.c.b16 %v513, %v509
    %v890 = vpack.c.b16 %v514, %v510
    %v891 = vpack.c.b16 %v515, %v511
    %v892 = vpack.c.b16 %v520, %v516
    %v893 = vpack.c.b16 %v521, %v517
    %v894 = vpack.c.b16 %v522, %v518
    %v895 = vpack.c.b16 %v523, %v519
    %v896 = vpack.c.b16 %v528, %v524
    %v897 = vpack.c.b16 %v529, %v525
    %v898 = vpack.c.b16 %v530, %v526
    %v899 = vpack.c.b16 %v531, %v527
    %v900 = vpack.c.b16 %v536, %v532
    %v901 = vpack.c.b16 %v537, %v533
    %v902 = vpack.c.b16 %v538, %v534
    %v903 = vpack.c.b16 %v539, %v535
    %v904 = vpack.c.b16 %v544, %v540
    %v905 = vpack.c.b16 %v545, %v541
    %v906 = vpack.c.b16 %v546, %v542
    %v907 = vpack.c.b16 %v547, %v543
    %v908 = vpack.c.b16 %v552, %v548
    %v909 = vpack.c.b16 %v553, %v549
    %v910 = vpack.c.b16 %v554, %v550
    %v911 = vpack.c.b16 %v555, %v551
    %v912 = vpack.c.b16 %v560, %v556
    %v913 = vpack.c.b16 %v561, %v557
    %v914 = vpack.c.b16 %v562, %v558
    %v915 = vpack.c.b16 %v563, %v559
    %v916 = vpack.c.b16 %v568, %v564
    %v917 = vpack.c.b16 %v569, %v565
    %v918 = vpack.c.b16 %v570, %v566
    %v919 = vpack.c.b16 %v571, %v567
    %v920 = vpack.c.b16 %v576, %v572
    %v921 = vpack.c.b16 %v577, %v573
    %v922 = vpack.c.b16 %v578, %v574
    %v923 = vpack.c.b16 %v579, %v575
    %v924 = vpack.c.b16 %v584, %v580
    %v925 = vpack.c.b16 %v585, %v581
    %v926 = vpack.c.b16 %v586, %v582
    %v927 = vpack.c.b16 %v587, %v583
    %v928 = vpack.c.b16 %v592, %v588
    %v929 = vpack.c.b16 %v593, %v589
    %v930 = vpack.c.b16 %v594, %v590
    %v931 = vpack.c.b16 %v595, %v591
    %v932 = vpack.c.b16 %v600, %v596
    %v933 = vpack.c.b16 %v601, %v597
    %v934 = vpack.c.b16 %v602, %v598
    %v935 = vpack.c.b16 %v603, %v599
    %v936 = vpack.c.b16 %v608, %v604
    %v937 = vpack.c.b16 %v609, %v605
    %v938 = vpack.c.b16 %v610, %v606
    %v939 = vpack.c.b16 %v611, %v607
    %v940 = vpack.c.b16 %v616, %v612
    %v941 = vpack.c.b16 %v617, %v613
    %v942 = vpack.c.b16 %v618, %v614
    %v943 = vpack.c.b16 %v619, %v615
    %v944 = vpack.c.b16 %v624, %v620
    %v945 = vpack.c.b16 %v625, %v621
    %v946 = vpack.c.b16 %v626, %v622
    %v947 = vpack.c.b16 %v627, %v623
    %v948 = vpack.c.b16 %v632, %v628
    %v949 = vpack.c.b16 %v633, %v629
    %v950 = vpack.c.b16 %v634, %v630
    %v951 = vpack.c.b16 %v635, %v631
    %v952 = vpack.c.b16 %v640, %v636
    %v953 = vpack.c.b16 %v641, %v637
    %v954 = vpack.c.b16 %v642, %v638
    %v955 = vpack.c.b16 %v643, %v639
    %v956 = vpack.c.b16 %v648, %v644
    %v957 = vpack.c.b16 %v649, %v645
    %v958 = vpack.c.b16 %v650, %v646
    %v959 = vpack.c.b16 %v651, %v647
    %v960 = vpack.c.b16 %v656, %v652
    %v961 = vpack.c.b16 %v657, %v653
    %v962 = vpack.c.b16 %v658, %v654
    %v963 = vpack.c.b16 %v659, %v655
    %v964 = vpack.c.b16 %v664, %v660
    %v965 = vpack.c.b16 %v665, %v661
    %v966 = vpack.c.b16 %v666, %v662
    %v967 = vpack.c.b16 %v667, %v663
    %v968 = vpack.c.b16 %v672, %v668
    %v969 = vpack.c.b16 %v673, %v669
    %v970 = vpack.c.b16 %v674, %v670
    %v971 = vpack.c.b16 %v675, %v671
    %v972 = vpack.c.b16 %v680, %v676
    %v973 = vpack.c.b16 %v681, %v677
    %v974 = vpack.c.b16 %v682, %v678
    %v975 = vpack.c.b16 %v683, %v679
    %v976 = vpack.c.b16 %v688, %v684
    %v977 = vpack.c.b16 %v689, %v685
    %v978 = vpack.c.b16 %v690, %v686
    %v979 = vpack.c.b16 %v691, %v687
    %v980 = vpack.c.b16 %v696, %v692
    %v981 = vpack.c.b16 %v697, %v693
    %v982 = vpack.c.b16 %v698, %v694
    %v983 = vpack.c.b16 %v699, %v695
    %v984 = vpack.c.b16 %v704, %v700
    %v985 = vpack.c.b16 %v705, %v701
    %v986 = vpack.c.b16 %v706, %v702
    %v987 = vpack.c.b16 %v707, %v703
    %v988 = vpack.c.b16 %v712, %v708
    %v989 = vpack.c.b16 %v713, %v709
    %v990 = vpack.c.b16 %v714, %v710
    %v991 = vpack.c.b16 %v715, %v711
    %v992 = vpack.c.b16 %v720, %v716
    %v993 = vpack.c.b16 %v721, %v717
    %v994 = vpack.c.b16 %v722, %v718
    %v995 = vpack.c.b16 %v723, %v719
    %v996 = vpack.c.b16 %v728, %v724
    %v997 = vpack.c.b16 %v729, %v725
    %v998 = vpack.c.b16 %v730, %v726
    %v999 = vpack.c.b16 %v731, %v727
    %v1000 = vpack.c.b16 %v736, %v732
    %v1001 = vpack.c.b16 %v737, %v733
    %v1002 = vpack.c.b16 %v738, %v734
    %v1003 = vpack.c.b16 %v739, %v735
    %v1004 = vpack.c.b16 %v744, %v740
    %v1005 = vpack.c.b16 %v745, %v741
    %v1006 = vpack.c.b16 %v746, %v742
    %v1007 = vpack.c.b16 %v747, %v743
    %v1008 = vpack.c.b16 %v752, %v748
    %v1009 = vpack.c.b16 %v753, %v749
    %v1010 = vpack.c.b16 %v754, %v750
    %v1011 = vpack.c.b16 %v755, %v751
    %v1012 = vpack.c.b16 %v760, %v756
    %v1013 = vpack.c.b16 %v761, %v757
    %v1014 = vpack.c.b16 %v762, %v758
    %v1015 = vpack.c.b16 %v763, %v759
    %v1016 = vpack.c.b16 %v768, %v764
    %v1017 = vpack.c.b16 %v769, %v765
    %v1018 = vpack.c.b16 %v770, %v766
    %v1019 = vpack.c.b16 %v771, %v767
    %v1020 = vpack.c.b16 %v776, %v772
    %v1021 = vpack.c.b16 %v777, %v773
    %v1022 = vpack.c.b16 %v778, %v774
    %v1023 = vpack.c.b16 %v779, %v775
    %v1024 = vpack.c.b16 %v784, %v780
    %v1025 = vpack.c.b16 %v785, %v781
    %v1026 = vpack.c.b16 %v786, %v782
    %v1027 = vpack.c.b16 %v787, %v783
    %v1028 = vpack.c.b16 %v792, %v788
    %v1029 = vpack.c.b16 %v793, %v789
    %v1030 = vpack.c.b16 %v794, %v790
    %v1031 = vpack.c.b16 %v795, %v791
    %v1032 = vpack.c.b16 %v800, %v796
    %v1033 = vpack.c.b16 %v801, %v797
    %v1034 = vpack.c.b16 %v802, %v798
    %v1035 = vpack.c.b16 %v803, %v799
    %v1036 = vpack.c.b16 %v808, %v804
    %v1037 = vpack.c.b16 %v809, %v805
    %v1038 = vpack.c.b16 %v810, %v806
    %v1039 = vpack.c.b16 %v811, %v807
    %v1040 = vpack.c.b16 %v816, %v812
    %v1041 = vpack.c.b16 %v817, %v813
    %v1042 = vpack.c.b16 %v818, %v814
    %v1043 = vpack.c.b16 %v819, %v815
    %v1044 = vpack.c.b16 %v824, %v820
    %v1045 = vpack.c.b16 %v825, %v821
    %v1046 = vpack.c.b16 %v826, %v822
    %v1047 = vpack.c.b16 %v827, %v823
    %v1048 = vpack.c.b16 %v832, %v828
    %v1049 = vpack.c.b16 %v833, %v829
    %v1050 = vpack.c.b16 %v834, %v830
    %v1051 = vpack.c.b16 %v835, %v831
    %v1052 = vpack.c.b16 %v840, %v836
    %v1053 = vpack.c.b16 %v841, %v837
    %v1054 = vpack.c.b16 %v842, %v838
    %v1055 = vpack.c.b16 %v843, %v839
    %v1056 = vpack.c.b16 %v848, %v844
    %v1057 = vpack.c.b16 %v849, %v845
    %v1058 = vpack.c.b16 %v850, %v846
    %v1059 = vpack.c.b16 %v851, %v847
    %v1060 = vpack.c.b16 %v856, %v852
    %v1061 = vpack.c.b16 %v857, %v853
    %v1062 = vpack.c.b16 %v858, %v854
    %v1063 = vpack.c.b16 %v859, %v855
    %v1064 = vpack.c.b16 %v864, %v860
    %v1065 = vpack.c.b16 %v865, %v861
    %v1066 = vpack.c.b16 %v866, %v862
    %v1067 = vpack.c.b16 %v867, %v863
    %v1068 = vpack.c.b16 %v872, %v868
    %v1069 = vpack.c.b16 %v873, %v869
    %v1070 = vpack.c.b16 %v874, %v870
    %v1071 = vpack.c.b16 %v875, %v871
    %vm1268 = vcmask 130048
    %v1270 = vsel %vm1268, %v69, 0
    %1272 = vmatprep.subr.bf16.mxu0 %v905
    %1273 = vmatpush1.bf16.msra.mxu0 %v904
    %1274 = vmatprep.subr.bf16.mxu0 %v901
    %1275 = vmatpush1.bf16.msra.mxu0 %v900
    %1276 = vmatprep.subr.bf16.mxu0 %v897
    %1277 = vmatpush1.bf16.msra.mxu0 %v896
    %1278 = vmatprep.subr.bf16.mxu0 %v893
    %1279 = vmatpush1.bf16.msra.mxu0 %v892
    %1280 = vmatprep.subr.bf16.mxu0 %v889
    %1281 = vmatpush1.bf16.msra.mxu0 %v888
    %1282 = vmatprep.subr.bf16.mxu0 %v885
    %1283 = vmatpush1.bf16.msra.mxu0 %v884
    %1284 = vmatprep.subr.bf16.mxu0 %v881
    %1285 = vmatpush1.bf16.msra.mxu0 %v880
    %1286 = vmatprep.subr.bf16.mxu0 %v877
    %1287 = vmatpush1.bf16.msra.mxu0 %v876
    %1288 = vmatprep.subr.bf16.mxu0 %v937
    %1289 = vmatpush2.bf16.msra.mxu0 %v936
    %1290 = vmatprep.subr.bf16.mxu0 %v933
    %1291 = vmatpush2.bf16.msra.mxu0 %v932
    %1292 = vmatprep.subr.bf16.mxu0 %v929
    %1293 = vmatpush2.bf16.msra.mxu0 %v928
    %1294 = vmatprep.subr.bf16.mxu0 %v925
    %1295 = vmatpush2.bf16.msra.mxu0 %v924
    %1296 = vmatprep.subr.bf16.mxu0 %v921
    %1297 = vmatpush2.bf16.msra.mxu0 %v920
    %1298 = vmatprep.subr.bf16.mxu0 %v917
    %1299 = vmatpush2.bf16.msra.mxu0 %v916
    %1300 = vmatprep.subr.bf16.mxu0 %v913
    %1301 = vmatpush2.bf16.msra.mxu0 %v912
    %1302 = vmatprep.subr.bf16.mxu0 %v909
    %1303 = vmatpush2.bf16.msra.mxu0 %v908
    %1304 = vmatprep.mubr.bf16.mxu0 %v64
    %1305 = vmatmul.mubr.bf16.gmra.mxu0 %v63
    %v1306 = vpop.f32.mrf.mxu0
    %v1307 = vadd.f32 %v271, %v1306
    %v1308 = vpop.f32.mrf.mxu0
    %v1309 = vadd.f32 %v275, %v1308
    %v1310 = vpop.f32.mrf.mxu0
    %v1311 = vpop.f32.mrf.mxu0
    %1312 = vdwg.mxu0
    %1313 = vmatprep.subr.bf16.mxu0 %v969
    %1314 = vmatpush1.bf16.msra.mxu0 %v968
    %1315 = vmatprep.subr.bf16.mxu0 %v965
    %1316 = vmatpush1.bf16.msra.mxu0 %v964
    %1317 = vmatprep.subr.bf16.mxu0 %v961
    %1318 = vmatpush1.bf16.msra.mxu0 %v960
    %1319 = vmatprep.subr.bf16.mxu0 %v957
    %1320 = vmatpush1.bf16.msra.mxu0 %v956
    %1321 = vmatprep.subr.bf16.mxu0 %v953
    %1322 = vmatpush1.bf16.msra.mxu0 %v952
    %1323 = vmatprep.subr.bf16.mxu0 %v949
    %1324 = vmatpush1.bf16.msra.mxu0 %v948
    %1325 = vmatprep.subr.bf16.mxu0 %v945
    %1326 = vmatpush1.bf16.msra.mxu0 %v944
    %1327 = vmatprep.subr.bf16.mxu0 %v941
    %1328 = vmatpush1.bf16.msra.mxu0 %v940
    %1329 = vmatprep.subr.bf16.mxu0 %v1001
    %1330 = vmatpush2.bf16.msra.mxu0 %v1000
    %1331 = vmatprep.subr.bf16.mxu0 %v997
    %1332 = vmatpush2.bf16.msra.mxu0 %v996
    %1333 = vmatprep.subr.bf16.mxu0 %v993
    %1334 = vmatpush2.bf16.msra.mxu0 %v992
    %1335 = vmatprep.subr.bf16.mxu0 %v989
    %1336 = vmatpush2.bf16.msra.mxu0 %v988
    %1337 = vmatprep.subr.bf16.mxu0 %v985
    %1338 = vmatpush2.bf16.msra.mxu0 %v984
    %1339 = vmatprep.subr.bf16.mxu0 %v981
    %1340 = vmatpush2.bf16.msra.mxu0 %v980
    %1341 = vmatprep.subr.bf16.mxu0 %v977
    %1342 = vmatpush2.bf16.msra.mxu0 %v976
    %1343 = vmatprep.subr.bf16.mxu0 %v973
    %1344 = vmatpush2.bf16.msra.mxu0 %v972
    %1345 = vmatprep.mubr.bf16.mxu0 %v66
    %1346 = vmatmul.mubr.bf16.gmra.mxu0 %v65
    %v1347 = vpop.f32.mrf.mxu0
    %v1348 = vadd.f32 %v1307, %v1347
    %v1349 = vpop.f32.mrf.mxu0
    %v1350 = vadd.f32 %v1309, %v1349
    %v1351 = vpop.f32.mrf.mxu0
    %v1352 = vpop.f32.mrf.mxu0
    %1353 = vdwg.mxu0
    %1354 = vmatprep.subr.bf16.mxu0 %v1033
    %1355 = vmatpush1.bf16.msra.mxu0 %v1032
    %1356 = vmatprep.subr.bf16.mxu0 %v1029
    %1357 = vmatpush1.bf16.msra.mxu0 %v1028
    %1358 = vmatprep.subr.bf16.mxu0 %v1025
    %1359 = vmatpush1.bf16.msra.mxu0 %v1024
    %1360 = vmatprep.subr.bf16.mxu0 %v1021
    %1361 = vmatpush1.bf16.msra.mxu0 %v1020
    %1362 = vmatprep.subr.bf16.mxu0 %v1017
    %1363 = vmatpush1.bf16.msra.mxu0 %v1016
    %1364 = vmatprep.subr.bf16.mxu0 %v1013
    %1365 = vmatpush1.bf16.msra.mxu0 %v1012
    %1366 = vmatprep.subr.bf16.mxu0 %v1009
    %1367 = vmatpush1.bf16.msra.mxu0 %v1008
    %1368 = vmatprep.subr.bf16.mxu0 %v1005
    %1369 = vmatpush1.bf16.msra.mxu0 %v1004
    %1370 = vmatprep.subr.bf16.mxu0 %v1065
    %1371 = vmatpush2.bf16.msra.mxu0 %v1064
    %1372 = vmatprep.subr.bf16.mxu0 %v1061
    %1373 = vmatpush2.bf16.msra.mxu0 %v1060
    %1374 = vmatprep.subr.bf16.mxu0 %v1057
    %1375 = vmatpush2.bf16.msra.mxu0 %v1056
    %1376 = vmatprep.subr.bf16.mxu0 %v1053
    %1377 = vmatpush2.bf16.msra.mxu0 %v1052
    %1378 = vmatprep.subr.bf16.mxu0 %v1049
    %1379 = vmatpush2.bf16.msra.mxu0 %v1048
    %1380 = vmatprep.subr.bf16.mxu0 %v1045
    %1381 = vmatpush2.bf16.msra.mxu0 %v1044
    %1382 = vmatprep.subr.bf16.mxu0 %v1041
    %1383 = vmatpush2.bf16.msra.mxu0 %v1040
    %1384 = vmatprep.subr.bf16.mxu0 %v1037
    %1385 = vmatpush2.bf16.msra.mxu0 %v1036
    %1386 = vmatprep.mubr.bf16.mxu0 %v68
    %1387 = vmatmul.mubr.bf16.gmra.mxu0 %v67
    %v1388 = vpop.f32.mrf.mxu0
    %v1389 = vadd.f32 %v1348, %v1388
    %v1390 = vpop.f32.mrf.mxu0
    %v1391 = vadd.f32 %v1350, %v1390
    %v1392 = vpop.f32.mrf.mxu0
    %v1393 = vpop.f32.mrf.mxu0
    %1394 = vdwg.mxu0
    %1395 = vmatprep.subr.bf16.mxu0 0
    %1396 = vmatpush1.bf16.msra.mxu0 0
    %1397 = vmatprep.subr.bf16.mxu0 0
    %1398 = vmatpush1.bf16.msra.mxu0 0
    %1399 = vmatprep.subr.bf16.mxu0 0
    %1400 = vmatpush1.bf16.msra.mxu0 0
    %1401 = vmatprep.subr.bf16.mxu0 0
    %1402 = vmatpush1.bf16.msra.mxu0 0
    %1403 = vmatprep.subr.bf16.mxu0 0
    %1404 = vmatpush1.bf16.msra.mxu0 0
    %1405 = vmatprep.subr.bf16.mxu0 0
    %1406 = vmatpush1.bf16.msra.mxu0 0
    %1407 = vmatprep.subr.bf16.mxu0 0
    %1408 = vmatpush1.bf16.msra.mxu0 0
    %1409 = vmatprep.subr.bf16.mxu0 %v1069
    %1410 = vmatpush1.bf16.msra.mxu0 %v1068
    %1411 = vmatprep.subr.bf16.mxu0 0
    %1412 = vmatpush2.bf16.msra.mxu0 0
    %1413 = vmatprep.subr.bf16.mxu0 0
    %1414 = vmatpush2.bf16.msra.mxu0 0
    %1415 = vmatprep.subr.bf16.mxu0 0
    %1416 = vmatpush2.bf16.msra.mxu0 0
    %1417 = vmatprep.subr.bf16.mxu0 0
    %1418 = vmatpush2.bf16.msra.mxu0 0
    %1419 = vmatprep.subr.bf16.mxu0 0
    %1420 = vmatpush2.bf16.msra.mxu0 0
    %1421 = vmatprep.subr.bf16.mxu0 0
    %1422 = vmatpush2.bf16.msra.mxu0 0
    %1423 = vmatprep.subr.bf16.mxu0 0
    %1424 = vmatpush2.bf16.msra.mxu0 0
    %1425 = vmatprep.subr.bf16.mxu0 0
    %1426 = vmatpush2.bf16.msra.mxu0 0
    %1427 = vmatprep.mubr.bf16.mxu0 0
    %1428 = vmatmul.mubr.bf16.gmra.mxu0 %v1270
    %v1429 = vpop.f32.mrf.mxu0
    %v1430 = vadd.f32 %v1389, %v1429
    %v1431 = vpop.f32.mrf.mxu0
    %v1432 = vadd.f32 %v1391, %v1431
    %v1433 = vpop.f32.mrf.mxu0
    %v1434 = vpop.f32.mrf.mxu0
    %1435 = vdwg.mxu0
    %1436 = vmatprep.subr.bf16.mxu0 %v907
    %1437 = vmatpush1.bf16.msra.mxu0 %v906
    %1438 = vmatprep.subr.bf16.mxu0 %v903
    %1439 = vmatpush1.bf16.msra.mxu0 %v902
    %1440 = vmatprep.subr.bf16.mxu0 %v899
    %1441 = vmatpush1.bf16.msra.mxu0 %v898
    %1442 = vmatprep.subr.bf16.mxu0 %v895
    %1443 = vmatpush1.bf16.msra.mxu0 %v894
    %1444 = vmatprep.subr.bf16.mxu0 %v891
    %1445 = vmatpush1.bf16.msra.mxu0 %v890
    %1446 = vmatprep.subr.bf16.mxu0 %v887
    %1447 = vmatpush1.bf16.msra.mxu0 %v886
    %1448 = vmatprep.subr.bf16.mxu0 %v883
    %1449 = vmatpush1.bf16.msra.mxu0 %v882
    %1450 = vmatprep.subr.bf16.mxu0 %v879
    %1451 = vmatpush1.bf16.msra.mxu0 %v878
    %1452 = vmatprep.subr.bf16.mxu0 %v939
    %1453 = vmatpush2.bf16.msra.mxu0 %v938
    %1454 = vmatprep.subr.bf16.mxu0 %v935
    %1455 = vmatpush2.bf16.msra.mxu0 %v934
    %1456 = vmatprep.subr.bf16.mxu0 %v931
    %1457 = vmatpush2.bf16.msra.mxu0 %v930
    %1458 = vmatprep.subr.bf16.mxu0 %v927
    %1459 = vmatpush2.bf16.msra.mxu0 %v926
    %1460 = vmatprep.subr.bf16.mxu0 %v923
    %1461 = vmatpush2.bf16.msra.mxu0 %v922
    %1462 = vmatprep.subr.bf16.mxu0 %v919
    %1463 = vmatpush2.bf16.msra.mxu0 %v918
    %1464 = vmatprep.subr.bf16.mxu0 %v915
    %1465 = vmatpush2.bf16.msra.mxu0 %v914
    %1466 = vmatprep.subr.bf16.mxu0 %v911
    %1467 = vmatpush2.bf16.msra.mxu0 %v910
    %1468 = vmatprep.mubr.bf16.mxu0 %v64
    %1469 = vmatmul.mubr.bf16.gmra.mxu0 %v63
    %v1470 = vpop.f32.mrf.mxu0
    %v1471 = vadd.f32 %v279, %v1470
    %v1472 = vpop.f32.mrf.mxu0
    %v1473 = vadd.f32 %v283, %v1472
    %v1474 = vpop.f32.mrf.mxu0
    %v1475 = vpop.f32.mrf.mxu0
    %1476 = vdwg.mxu0
    %1477 = vmatprep.subr.bf16.mxu0 %v971
    %1478 = vmatpush1.bf16.msra.mxu0 %v970
    %1479 = vmatprep.subr.bf16.mxu0 %v967
    %1480 = vmatpush1.bf16.msra.mxu0 %v966
    %1481 = vmatprep.subr.bf16.mxu0 %v963
    %1482 = vmatpush1.bf16.msra.mxu0 %v962
    %1483 = vmatprep.subr.bf16.mxu0 %v959
    %1484 = vmatpush1.bf16.msra.mxu0 %v958
    %1485 = vmatprep.subr.bf16.mxu0 %v955
    %1486 = vmatpush1.bf16.msra.mxu0 %v954
    %1487 = vmatprep.subr.bf16.mxu0 %v951
    %1488 = vmatpush1.bf16.msra.mxu0 %v950
    %1489 = vmatprep.subr.bf16.mxu0 %v947
    %1490 = vmatpush1.bf16.msra.mxu0 %v946
    %1491 = vmatprep.subr.bf16.mxu0 %v943
    %1492 = vmatpush1.bf16.msra.mxu0 %v942
    %1493 = vmatprep.subr.bf16.mxu0 %v1003
    %1494 = vmatpush2.bf16.msra.mxu0 %v1002
    %1495 = vmatprep.subr.bf16.mxu0 %v999
    %1496 = vmatpush2.bf16.msra.mxu0 %v998
    %1497 = vmatprep.subr.bf16.mxu0 %v995
    %1498 = vmatpush2.bf16.msra.mxu0 %v994
    %1499 = vmatprep.subr.bf16.mxu0 %v991
    %1500 = vmatpush2.bf16.msra.mxu0 %v990
    %1501 = vmatprep.subr.bf16.mxu0 %v987
    %1502 = vmatpush2.bf16.msra.mxu0 %v986
    %1503 = vmatprep.subr.bf16.mxu0 %v983
    %1504 = vmatpush2.bf16.msra.mxu0 %v982
    %1505 = vmatprep.subr.bf16.mxu0 %v979
    %1506 = vmatpush2.bf16.msra.mxu0 %v978
    %1507 = vmatprep.subr.bf16.mxu0 %v975
    %1508 = vmatpush2.bf16.msra.mxu0 %v974
    %1509 = vmatprep.mubr.bf16.mxu0 %v66
    %1510 = vmatmul.mubr.bf16.gmra.mxu0 %v65
    %v1511 = vpop.f32.mrf.mxu0
    %v1512 = vadd.f32 %v1471, %v1511
    %v1513 = vpop.f32.mrf.mxu0
    %v1514 = vadd.f32 %v1473, %v1513
    %v1515 = vpop.f32.mrf.mxu0
    %v1516 = vpop.f32.mrf.mxu0
    %1517 = vdwg.mxu0
    %1518 = vmatprep.subr.bf16.mxu0 %v1035
    %1519 = vmatpush1.bf16.msra.mxu0 %v1034
    %1520 = vmatprep.subr.bf16.mxu0 %v1031
    %1521 = vmatpush1.bf16.msra.mxu0 %v1030
    %1522 = vmatprep.subr.bf16.mxu0 %v1027
    %1523 = vmatpush1.bf16.msra.mxu0 %v1026
    %1524 = vmatprep.subr.bf16.mxu0 %v1023
    %1525 = vmatpush1.bf16.msra.mxu0 %v1022
    %1526 = vmatprep.subr.bf16.mxu0 %v1019
    %1527 = vmatpush1.bf16.msra.mxu0 %v1018
    %1528 = vmatprep.subr.bf16.mxu0 %v1015
    %1529 = vmatpush1.bf16.msra.mxu0 %v1014
    %1530 = vmatprep.subr.bf16.mxu0 %v1011
    %1531 = vmatpush1.bf16.msra.mxu0 %v1010
    %1532 = vmatprep.subr.bf16.mxu0 %v1007
    %1533 = vmatpush1.bf16.msra.mxu0 %v1006
    %1534 = vmatprep.subr.bf16.mxu0 %v1067
    %1535 = vmatpush2.bf16.msra.mxu0 %v1066
    %1536 = vmatprep.subr.bf16.mxu0 %v1063
    %1537 = vmatpush2.bf16.msra.mxu0 %v1062
    %1538 = vmatprep.subr.bf16.mxu0 %v1059
    %1539 = vmatpush2.bf16.msra.mxu0 %v1058
    %1540 = vmatprep.subr.bf16.mxu0 %v1055
    %1541 = vmatpush2.bf16.msra.mxu0 %v1054
    %1542 = vmatprep.subr.bf16.mxu0 %v1051
    %1543 = vmatpush2.bf16.msra.mxu0 %v1050
    %1544 = vmatprep.subr.bf16.mxu0 %v1047
    %1545 = vmatpush2.bf16.msra.mxu0 %v1046
    %1546 = vmatprep.subr.bf16.mxu0 %v1043
    %1547 = vmatpush2.bf16.msra.mxu0 %v1042
    %1548 = vmatprep.subr.bf16.mxu0 %v1039
    %1549 = vmatpush2.bf16.msra.mxu0 %v1038
    %1550 = vmatprep.mubr.bf16.mxu0 %v68
    %1551 = vmatmul.mubr.bf16.gmra.mxu0 %v67
    %v1552 = vpop.f32.mrf.mxu0
    %v1553 = vadd.f32 %v1512, %v1552
    %v1554 = vpop.f32.mrf.mxu0
    %v1555 = vadd.f32 %v1514, %v1554
    %v1556 = vpop.f32.mrf.mxu0
    %v1557 = vpop.f32.mrf.mxu0
    %1558 = vdwg.mxu0
    %1559 = vmatprep.subr.bf16.mxu0 0
    %1560 = vmatpush1.bf16.msra.mxu0 0
    %1561 = vmatprep.subr.bf16.mxu0 0
    %1562 = vmatpush1.bf16.msra.mxu0 0
    %1563 = vmatprep.subr.bf16.mxu0 0
    %1564 = vmatpush1.bf16.msra.mxu0 0
    %1565 = vmatprep.subr.bf16.mxu0 0
    %1566 = vmatpush1.bf16.msra.mxu0 0
    %1567 = vmatprep.subr.bf16.mxu0 0
    %1568 = vmatpush1.bf16.msra.mxu0 0
    %1569 = vmatprep.subr.bf16.mxu0 0
    %1570 = vmatpush1.bf16.msra.mxu0 0
    %1571 = vmatprep.subr.bf16.mxu0 0
    %1572 = vmatpush1.bf16.msra.mxu0 0
    %1573 = vmatprep.subr.bf16.mxu0 %v1071
    %1574 = vmatpush1.bf16.msra.mxu0 %v1070
    %1575 = vmatprep.subr.bf16.mxu0 0
    %1576 = vmatpush2.bf16.msra.mxu0 0
    %1577 = vmatprep.subr.bf16.mxu0 0
    %1578 = vmatpush2.bf16.msra.mxu0 0
    %1579 = vmatprep.subr.bf16.mxu0 0
    %1580 = vmatpush2.bf16.msra.mxu0 0
    %1581 = vmatprep.subr.bf16.mxu0 0
    %1582 = vmatpush2.bf16.msra.mxu0 0
    %1583 = vmatprep.subr.bf16.mxu0 0
    %1584 = vmatpush2.bf16.msra.mxu0 0
    %1585 = vmatprep.subr.bf16.mxu0 0
    %1586 = vmatpush2.bf16.msra.mxu0 0
    %1587 = vmatprep.subr.bf16.mxu0 0
    %1588 = vmatpush2.bf16.msra.mxu0 0
    %1589 = vmatprep.subr.bf16.mxu0 0
    %1590 = vmatpush2.bf16.msra.mxu0 0
    %1591 = vmatprep.mubr.bf16.mxu0 0
    %1592 = vmatmul.mubr.bf16.gmra.mxu0 %v1270
    %v1593 = vpop.f32.mrf.mxu0
    %v1594 = vadd.f32 %v1553, %v1593
    %v1595 = vpop.f32.mrf.mxu0
    %v1596 = vadd.f32 %v1555, %v1595
    %v1597 = vpop.f32.mrf.mxu0
    %v1598 = vpop.f32.mrf.mxu0
    %1599 = vdwg.mxu0
    %v1600 = vmax.f32 %v1430, 0.0
    %v1601 = vmax.f32 %v1432, 0.0
    %v1602 = vmax.f32 %v1594, 0.0
    %v1603 = vmax.f32 %v1596, 0.0
    %v1604 = vpack.c.bf16 %v1600, %v1600
    %v1605 = vpack.c.bf16 %v1601, %v1601
    %v1606 = vpack.c.bf16 %v1602, %v1602
    %v1607 = vpack.c.bf16 %v1603, %v1603
    %v1608 = vld [vmem:[#allocation5] sm:$0xff]
    %v1609 = vld [vmem:[#allocation5 + $0x8] sm:$0xff]
    %v1610 = vld [vmem:[#allocation5 + $0x10] sm:$0xff]
    %v1611 = vld [vmem:[#allocation5 + $0x18] sm:$0xff]
    %v1612 = vld [vmem:[#allocation5 + $0x20] sm:$0xff]
    %v1613 = vld [vmem:[#allocation5 + $0x28] sm:$0xff]
    %v1614 = vld [vmem:[#allocation5 + $0x30] sm:$0xff]
    %v1615 = vld [vmem:[#allocation5 + $0x38] sm:$0xff]
    %v1616 = vld [vmem:[#allocation5 + $0x40] sm:$0xff]
    %v1617 = vld [vmem:[#allocation5 + $0x48] sm:$0xff]
    %v1618 = vld [vmem:[#allocation5 + $0x50] sm:$0xff]
    %v1619 = vld [vmem:[#allocation5 + $0x58] sm:$0xff]
    %v1620 = vld [vmem:[#allocation5 + $0x60] sm:$0xff]
    %v1621 = vld [vmem:[#allocation5 + $0x68] sm:$0xff]
    %v1622 = vld [vmem:[#allocation5 + $0x70] sm:$0xff]
    %v1623 = vld [vmem:[#allocation5 + $0x78] sm:$0xff]
    %v1624 = vld [vmem:[#allocation5 + $0x80] sm:$0xff]
    %v1625 = vld [vmem:[#allocation5 + $0x88] sm:$0xff]
    %v1626 = vld [vmem:[#allocation5 + $0x90] sm:$0xff]
    %v1627 = vld [vmem:[#allocation5 + $0x98] sm:$0xff]
    %v1628 = vld [vmem:[#allocation5 + $0xa0] sm:$0xff]
    %v1629 = vld [vmem:[#allocation5 + $0xa8] sm:$0xff]
    %v1630 = vld [vmem:[#allocation5 + $0xb0] sm:$0xff]
    %v1631 = vld [vmem:[#allocation5 + $0xb8] sm:$0xff]
    %v1632 = vld [vmem:[#allocation5 + $0xc0] sm:$0xff]
    %v1633 = vld [vmem:[#allocation5 + $0xc8] sm:$0xff]
    %v1634 = vld [vmem:[#allocation5 + $0xd0] sm:$0xff]
    %v1635 = vld [vmem:[#allocation5 + $0xd8] sm:$0xff]
    %v1636 = vld [vmem:[#allocation5 + $0xe0] sm:$0xff]
    %v1637 = vld [vmem:[#allocation5 + $0xe8] sm:$0xff]
    %v1638 = vld [vmem:[#allocation5 + $0xf0] sm:$0xff]
    %v1639 = vld [vmem:[#allocation5 + $0xf8] sm:$0xff]
    %v1640 = vld [vmem:[#allocation5 + $0x100] sm:$0xff]
    %v1641 = vld [vmem:[#allocation5 + $0x108] sm:$0xff]
    %v1642 = vld [vmem:[#allocation5 + $0x110] sm:$0xff]
    %v1643 = vld [vmem:[#allocation5 + $0x118] sm:$0xff]
    %v1644 = vld [vmem:[#allocation5 + $0x120] sm:$0xff]
    %v1645 = vld [vmem:[#allocation5 + $0x128] sm:$0xff]
    %v1646 = vld [vmem:[#allocation5 + $0x130] sm:$0xff]
    %v1647 = vld [vmem:[#allocation5 + $0x138] sm:$0xff]
    %v1648 = vld [vmem:[#allocation5 + $0x140] sm:$0xff]
    %v1649 = vld [vmem:[#allocation5 + $0x148] sm:$0xff]
    %v1650 = vld [vmem:[#allocation5 + $0x150] sm:$0xff]
    %v1651 = vld [vmem:[#allocation5 + $0x158] sm:$0xff]
    %v1652 = vld [vmem:[#allocation5 + $0x160] sm:$0xff]
    %v1653 = vld [vmem:[#allocation5 + $0x168] sm:$0xff]
    %v1654 = vld [vmem:[#allocation5 + $0x170] sm:$0xff]
    %v1655 = vld [vmem:[#allocation5 + $0x178] sm:$0xff]
    %v1656 = vld [vmem:[#allocation5 + $0x180] sm:$0xff]
    %v1657 = vld [vmem:[#allocation5 + $0x188] sm:$0xff]
    %v1658 = vld [vmem:[#allocation5 + $0x190] sm:$0xff]
    %v1659 = vld [vmem:[#allocation5 + $0x198] sm:$0xff]
    %v1660 = vld [vmem:[#allocation5 + $0x1a0] sm:$0xff]
    %v1661 = vld [vmem:[#allocation5 + $0x1a8] sm:$0xff]
    %v1662 = vld [vmem:[#allocation5 + $0x1b0] sm:$0xff]
    %v1663 = vld [vmem:[#allocation5 + $0x1b8] sm:$0xff]
    %v1664 = vld [vmem:[#allocation5 + $0x1c0] sm:$0xff]
    %v1665 = vld [vmem:[#allocation5 + $0x1c8] sm:$0xff]
    %v1666 = vld [vmem:[#allocation5 + $0x1d0] sm:$0xff]
    %v1667 = vld [vmem:[#allocation5 + $0x1d8] sm:$0xff]
    %v1668 = vld [vmem:[#allocation5 + $0x1e0] sm:$0xff]
    %v1669 = vld [vmem:[#allocation5 + $0x1e8] sm:$0xff]
    %v1670 = vld [vmem:[#allocation5 + $0x1f0] sm:$0xff]
    %v1671 = vld [vmem:[#allocation5 + $0x1f8] sm:$0xff]
    %v1672 = vld [vmem:[#allocation5 + $0x200] sm:$0xff]
    %v1673 = vld [vmem:[#allocation5 + $0x208] sm:$0xff]
    %v1674 = vld [vmem:[#allocation5 + $0x210] sm:$0xff]
    %v1675 = vld [vmem:[#allocation5 + $0x218] sm:$0xff]
    %v1676 = vld [vmem:[#allocation5 + $0x220] sm:$0xff]
    %v1677 = vld [vmem:[#allocation5 + $0x228] sm:$0xff]
    %v1678 = vld [vmem:[#allocation5 + $0x230] sm:$0xff]
    %v1679 = vld [vmem:[#allocation5 + $0x238] sm:$0xff]
    %v1680 = vld [vmem:[#allocation5 + $0x240] sm:$0xff]
    %v1681 = vld [vmem:[#allocation5 + $0x248] sm:$0xff]
    %v1682 = vld [vmem:[#allocation5 + $0x250] sm:$0xff]
    %v1683 = vld [vmem:[#allocation5 + $0x258] sm:$0xff]
    %v1684 = vld [vmem:[#allocation5 + $0x260] sm:$0xff]
    %v1685 = vld [vmem:[#allocation5 + $0x268] sm:$0xff]
    %v1686 = vld [vmem:[#allocation5 + $0x270] sm:$0xff]
    %v1687 = vld [vmem:[#allocation5 + $0x278] sm:$0xff]
    %v1688 = vld [vmem:[#allocation5 + $0x280] sm:$0xff]
    %v1689 = vld [vmem:[#allocation5 + $0x288] sm:$0xff]
    %v1690 = vld [vmem:[#allocation5 + $0x290] sm:$0xff]
    %v1691 = vld [vmem:[#allocation5 + $0x298] sm:$0xff]
    %v1692 = vld [vmem:[#allocation5 + $0x2a0] sm:$0xff]
    %v1693 = vld [vmem:[#allocation5 + $0x2a8] sm:$0xff]
    %v1694 = vld [vmem:[#allocation5 + $0x2b0] sm:$0xff]
    %v1695 = vld [vmem:[#allocation5 + $0x2b8] sm:$0xff]
    %v1696 = vld [vmem:[#allocation5 + $0x2c0] sm:$0xff]
    %v1697 = vld [vmem:[#allocation5 + $0x2c8] sm:$0xff]
    %v1698 = vld [vmem:[#allocation5 + $0x2d0] sm:$0xff]
    %v1699 = vld [vmem:[#allocation5 + $0x2d8] sm:$0xff]
    %v1700 = vld [vmem:[#allocation5 + $0x2e0] sm:$0xff]
    %v1701 = vld [vmem:[#allocation5 + $0x2e8] sm:$0xff]
    %v1702 = vld [vmem:[#allocation5 + $0x2f0] sm:$0xff]
    %v1703 = vld [vmem:[#allocation5 + $0x2f8] sm:$0xff]
    %v1704 = vld [vmem:[#allocation5 + $0x300] sm:$0xff]
    %v1705 = vld [vmem:[#allocation5 + $0x308] sm:$0xff]
    %v1706 = vld [vmem:[#allocation5 + $0x310] sm:$0xff]
    %v1707 = vld [vmem:[#allocation5 + $0x318] sm:$0xff]
    %v1708 = vld [vmem:[#allocation5 + $0x320] sm:$0xff]
    %v1709 = vld [vmem:[#allocation5 + $0x328] sm:$0xff]
    %v1710 = vld [vmem:[#allocation5 + $0x330] sm:$0xff]
    %v1711 = vld [vmem:[#allocation5 + $0x338] sm:$0xff]
    %v1712 = vld [vmem:[#allocation5 + $0x340] sm:$0xff]
    %v1713 = vld [vmem:[#allocation5 + $0x348] sm:$0xff]
    %v1714 = vld [vmem:[#allocation5 + $0x350] sm:$0xff]
    %v1715 = vld [vmem:[#allocation5 + $0x358] sm:$0xff]
    %v1716 = vld [vmem:[#allocation5 + $0x360] sm:$0xff]
    %v1717 = vld [vmem:[#allocation5 + $0x368] sm:$0xff]
    %v1718 = vld [vmem:[#allocation5 + $0x370] sm:$0xff]
    %v1719 = vld [vmem:[#allocation5 + $0x378] sm:$0xff]
    %v1720 = vld [vmem:[#allocation5 + $0x380] sm:$0xff]
    %v1721 = vld [vmem:[#allocation5 + $0x388] sm:$0xff]
    %v1722 = vld [vmem:[#allocation5 + $0x390] sm:$0xff]
    %v1723 = vld [vmem:[#allocation5 + $0x398] sm:$0xff]
    %v1724 = vld [vmem:[#allocation5 + $0x3a0] sm:$0xff]
    %v1725 = vld [vmem:[#allocation5 + $0x3a8] sm:$0xff]
    %v1726 = vld [vmem:[#allocation5 + $0x3b0] sm:$0xff]
    %v1727 = vld [vmem:[#allocation5 + $0x3b8] sm:$0xff]
    %v1728 = vld [vmem:[#allocation5 + $0x3c0] sm:$0xff]
    %v1729 = vld [vmem:[#allocation5 + $0x3c8] sm:$0xff]
    %v1730 = vld [vmem:[#allocation5 + $0x3d0] sm:$0xff]
    %v1731 = vld [vmem:[#allocation5 + $0x3d8] sm:$0xff]
    %v1732 = vld [vmem:[#allocation5 + $0x3e0] sm:$0xff]
    %v1733 = vld [vmem:[#allocation5 + $0x3e8] sm:$0xff]
    %v1734 = vld [vmem:[#allocation5 + $0x3f0] sm:$0xff]
    %v1735 = vld [vmem:[#allocation5 + $0x3f8] sm:$0xff]
    %v1736 = vld [vmem:[%s4] sm:$0xf]
    %v1738 = vlaneseq
    %v1739 = vshrl.u32 %v1738, 7
    %v1740 = vsub.s32 0, %v1739
    %v1741 = vrot.slane %v1736, %v1740
    %v1742 = vlaneseq
    %v1743 = vshrl.u32 %v1742, 7
    %v1744 = vsub.s32 1, %v1743
    %v1745 = vrot.slane %v1736, %v1744
    %v1746 = vlaneseq
    %v1747 = vshrl.u32 %v1746, 7
    %v1748 = vsub.s32 2, %v1747
    %v1749 = vrot.slane %v1736, %v1748
    %v1750 = vlaneseq
    %v1751 = vshrl.u32 %v1750, 7
    %v1752 = vsub.s32 3, %v1751
    %v1753 = vrot.slane %v1736, %v1752
    %v1886 = vunpack.c.l.b16 %v1608
    %v1887 = vunpack.c.h.b16 %v1608
    %v1888 = vunpack.c.l.b16 %v1609
    %v1889 = vunpack.c.h.b16 %v1609
    %v1890 = vunpack.c.l.b16 %v1610
    %v1891 = vunpack.c.h.b16 %v1610
    %v1892 = vunpack.c.l.b16 %v1611
    %v1893 = vunpack.c.h.b16 %v1611
    %v1894 = vunpack.c.l.b16 %v1612
    %v1895 = vunpack.c.h.b16 %v1612
    %v1896 = vunpack.c.l.b16 %v1613
    %v1897 = vunpack.c.h.b16 %v1613
    %v1898 = vunpack.c.l.b16 %v1614
    %v1899 = vunpack.c.h.b16 %v1614
    %v1900 = vunpack.c.l.b16 %v1615
    %v1901 = vunpack.c.h.b16 %v1615
    %v1902 = vunpack.c.l.b16 %v1616
    %v1903 = vunpack.c.h.b16 %v1616
    %v1904 = vunpack.c.l.b16 %v1617
    %v1905 = vunpack.c.h.b16 %v1617
    %v1906 = vunpack.c.l.b16 %v1618
    %v1907 = vunpack.c.h.b16 %v1618
    %v1908 = vunpack.c.l.b16 %v1619
    %v1909 = vunpack.c.h.b16 %v1619
    %v1910 = vunpack.c.l.b16 %v1620
    %v1911 = vunpack.c.h.b16 %v1620
    %v1912 = vunpack.c.l.b16 %v1621
    %v1913 = vunpack.c.h.b16 %v1621
    %v1914 = vunpack.c.l.b16 %v1622
    %v1915 = vunpack.c.h.b16 %v1622
    %v1916 = vunpack.c.l.b16 %v1623
    %v1917 = vunpack.c.h.b16 %v1623
    %v1918 = vunpack.c.l.b16 %v1624
    %v1919 = vunpack.c.h.b16 %v1624
    %v1920 = vunpack.c.l.b16 %v1625
    %v1921 = vunpack.c.h.b16 %v1625
    %v1922 = vunpack.c.l.b16 %v1626
    %v1923 = vunpack.c.h.b16 %v1626
    %v1924 = vunpack.c.l.b16 %v1627
    %v1925 = vunpack.c.h.b16 %v1627
    %v1926 = vunpack.c.l.b16 %v1628
    %v1927 = vunpack.c.h.b16 %v1628
    %v1928 = vunpack.c.l.b16 %v1629
    %v1929 = vunpack.c.h.b16 %v1629
    %v1930 = vunpack.c.l.b16 %v1630
    %v1931 = vunpack.c.h.b16 %v1630
    %v1932 = vunpack.c.l.b16 %v1631
    %v1933 = vunpack.c.h.b16 %v1631
    %v1934 = vunpack.c.l.b16 %v1632
    %v1935 = vunpack.c.h.b16 %v1632
    %v1936 = vunpack.c.l.b16 %v1633
    %v1937 = vunpack.c.h.b16 %v1633
    %v1938 = vunpack.c.l.b16 %v1634
    %v1939 = vunpack.c.h.b16 %v1634
    %v1940 = vunpack.c.l.b16 %v1635
    %v1941 = vunpack.c.h.b16 %v1635
    %v1942 = vunpack.c.l.b16 %v1636
    %v1943 = vunpack.c.h.b16 %v1636
    %v1944 = vunpack.c.l.b16 %v1637
    %v1945 = vunpack.c.h.b16 %v1637
    %v1946 = vunpack.c.l.b16 %v1638
    %v1947 = vunpack.c.h.b16 %v1638
    %v1948 = vunpack.c.l.b16 %v1639
    %v1949 = vunpack.c.h.b16 %v1639
    %v1950 = vunpack.c.l.b16 %v1640
    %v1951 = vunpack.c.h.b16 %v1640
    %v1952 = vunpack.c.l.b16 %v1641
    %v1953 = vunpack.c.h.b16 %v1641
    %v1954 = vunpack.c.l.b16 %v1642
    %v1955 = vunpack.c.h.b16 %v1642
    %v1956 = vunpack.c.l.b16 %v1643
    %v1957 = vunpack.c.h.b16 %v1643
    %v1958 = vunpack.c.l.b16 %v1644
    %v1959 = vunpack.c.h.b16 %v1644
    %v1960 = vunpack.c.l.b16 %v1645
    %v1961 = vunpack.c.h.b16 %v1645
    %v1962 = vunpack.c.l.b16 %v1646
    %v1963 = vunpack.c.h.b16 %v1646
    %v1964 = vunpack.c.l.b16 %v1647
    %v1965 = vunpack.c.h.b16 %v1647
    %v1966 = vunpack.c.l.b16 %v1648
    %v1967 = vunpack.c.h.b16 %v1648
    %v1968 = vunpack.c.l.b16 %v1649
    %v1969 = vunpack.c.h.b16 %v1649
    %v1970 = vunpack.c.l.b16 %v1650
    %v1971 = vunpack.c.h.b16 %v1650
    %v1972 = vunpack.c.l.b16 %v1651
    %v1973 = vunpack.c.h.b16 %v1651
    %v1974 = vunpack.c.l.b16 %v1652
    %v1975 = vunpack.c.h.b16 %v1652
    %v1976 = vunpack.c.l.b16 %v1653
    %v1977 = vunpack.c.h.b16 %v1653
    %v1978 = vunpack.c.l.b16 %v1654
    %v1979 = vunpack.c.h.b16 %v1654
    %v1980 = vunpack.c.l.b16 %v1655
    %v1981 = vunpack.c.h.b16 %v1655
    %v1982 = vunpack.c.l.b16 %v1656
    %v1983 = vunpack.c.h.b16 %v1656
    %v1984 = vunpack.c.l.b16 %v1657
    %v1985 = vunpack.c.h.b16 %v1657
    %v1986 = vunpack.c.l.b16 %v1658
    %v1987 = vunpack.c.h.b16 %v1658
    %v1988 = vunpack.c.l.b16 %v1659
    %v1989 = vunpack.c.h.b16 %v1659
    %v1990 = vunpack.c.l.b16 %v1660
    %v1991 = vunpack.c.h.b16 %v1660
    %v1992 = vunpack.c.l.b16 %v1661
    %v1993 = vunpack.c.h.b16 %v1661
    %v1994 = vunpack.c.l.b16 %v1662
    %v1995 = vunpack.c.h.b16 %v1662
    %v1996 = vunpack.c.l.b16 %v1663
    %v1997 = vunpack.c.h.b16 %v1663
    %v1998 = vunpack.c.l.b16 %v1664
    %v1999 = vunpack.c.h.b16 %v1664
    %v2000 = vunpack.c.l.b16 %v1665
    %v2001 = vunpack.c.h.b16 %v1665
    %v2002 = vunpack.c.l.b16 %v1666
    %v2003 = vunpack.c.h.b16 %v1666
    %v2004 = vunpack.c.l.b16 %v1667
    %v2005 = vunpack.c.h.b16 %v1667
    %v2006 = vunpack.c.l.b16 %v1668
    %v2007 = vunpack.c.h.b16 %v1668
    %v2008 = vunpack.c.l.b16 %v1669
    %v2009 = vunpack.c.h.b16 %v1669
    %v2010 = vunpack.c.l.b16 %v1670
    %v2011 = vunpack.c.h.b16 %v1670
    %v2012 = vunpack.c.l.b16 %v1671
    %v2013 = vunpack.c.h.b16 %v1671
    %v2014 = vunpack.c.l.b16 %v1672
    %v2015 = vunpack.c.h.b16 %v1672
    %v2016 = vunpack.c.l.b16 %v1673
    %v2017 = vunpack.c.h.b16 %v1673
    %v2018 = vunpack.c.l.b16 %v1674
    %v2019 = vunpack.c.h.b16 %v1674
    %v2020 = vunpack.c.l.b16 %v1675
    %v2021 = vunpack.c.h.b16 %v1675
    %v2022 = vunpack.c.l.b16 %v1676
    %v2023 = vunpack.c.h.b16 %v1676
    %v2024 = vunpack.c.l.b16 %v1677
    %v2025 = vunpack.c.h.b16 %v1677
    %v2026 = vunpack.c.l.b16 %v1678
    %v2027 = vunpack.c.h.b16 %v1678
    %v2028 = vunpack.c.l.b16 %v1679
    %v2029 = vunpack.c.h.b16 %v1679
    %v2030 = vunpack.c.l.b16 %v1680
    %v2031 = vunpack.c.h.b16 %v1680
    %v2032 = vunpack.c.l.b16 %v1681
    %v2033 = vunpack.c.h.b16 %v1681
    %v2034 = vunpack.c.l.b16 %v1682
    %v2035 = vunpack.c.h.b16 %v1682
    %v2036 = vunpack.c.l.b16 %v1683
    %v2037 = vunpack.c.h.b16 %v1683
    %v2038 = vunpack.c.l.b16 %v1684
    %v2039 = vunpack.c.h.b16 %v1684
    %v2040 = vunpack.c.l.b16 %v1685
    %v2041 = vunpack.c.h.b16 %v1685
    %v2042 = vunpack.c.l.b16 %v1686
    %v2043 = vunpack.c.h.b16 %v1686
    %v2044 = vunpack.c.l.b16 %v1687
    %v2045 = vunpack.c.h.b16 %v1687
    %v2046 = vunpack.c.l.b16 %v1688
    %v2047 = vunpack.c.h.b16 %v1688
    %v2048 = vunpack.c.l.b16 %v1689
    %v2049 = vunpack.c.h.b16 %v1689
    %v2050 = vunpack.c.l.b16 %v1690
    %v2051 = vunpack.c.h.b16 %v1690
    %v2052 = vunpack.c.l.b16 %v1691
    %v2053 = vunpack.c.h.b16 %v1691
    %v2054 = vunpack.c.l.b16 %v1692
    %v2055 = vunpack.c.h.b16 %v1692
    %v2056 = vunpack.c.l.b16 %v1693
    %v2057 = vunpack.c.h.b16 %v1693
    %v2058 = vunpack.c.l.b16 %v1694
    %v2059 = vunpack.c.h.b16 %v1694
    %v2060 = vunpack.c.l.b16 %v1695
    %v2061 = vunpack.c.h.b16 %v1695
    %v2062 = vunpack.c.l.b16 %v1696
    %v2063 = vunpack.c.h.b16 %v1696
    %v2064 = vunpack.c.l.b16 %v1697
    %v2065 = vunpack.c.h.b16 %v1697
    %v2066 = vunpack.c.l.b16 %v1698
    %v2067 = vunpack.c.h.b16 %v1698
    %v2068 = vunpack.c.l.b16 %v1699
    %v2069 = vunpack.c.h.b16 %v1699
    %v2070 = vunpack.c.l.b16 %v1700
    %v2071 = vunpack.c.h.b16 %v1700
    %v2072 = vunpack.c.l.b16 %v1701
    %v2073 = vunpack.c.h.b16 %v1701
    %v2074 = vunpack.c.l.b16 %v1702
    %v2075 = vunpack.c.h.b16 %v1702
    %v2076 = vunpack.c.l.b16 %v1703
    %v2077 = vunpack.c.h.b16 %v1703
    %v2078 = vunpack.c.l.b16 %v1704
    %v2079 = vunpack.c.h.b16 %v1704
    %v2080 = vunpack.c.l.b16 %v1705
    %v2081 = vunpack.c.h.b16 %v1705
    %v2082 = vunpack.c.l.b16 %v1706
    %v2083 = vunpack.c.h.b16 %v1706
    %v2084 = vunpack.c.l.b16 %v1707
    %v2085 = vunpack.c.h.b16 %v1707
    %v2086 = vunpack.c.l.b16 %v1708
    %v2087 = vunpack.c.h.b16 %v1708
    %v2088 = vunpack.c.l.b16 %v1709
    %v2089 = vunpack.c.h.b16 %v1709
    %v2090 = vunpack.c.l.b16 %v1710
    %v2091 = vunpack.c.h.b16 %v1710
    %v2092 = vunpack.c.l.b16 %v1711
    %v2093 = vunpack.c.h.b16 %v1711
    %v2094 = vunpack.c.l.b16 %v1712
    %v2095 = vunpack.c.h.b16 %v1712
    %v2096 = vunpack.c.l.b16 %v1713
    %v2097 = vunpack.c.h.b16 %v1713
    %v2098 = vunpack.c.l.b16 %v1714
    %v2099 = vunpack.c.h.b16 %v1714
    %v2100 = vunpack.c.l.b16 %v1715
    %v2101 = vunpack.c.h.b16 %v1715
    %v2102 = vunpack.c.l.b16 %v1716
    %v2103 = vunpack.c.h.b16 %v1716
    %v2104 = vunpack.c.l.b16 %v1717
    %v2105 = vunpack.c.h.b16 %v1717
    %v2106 = vunpack.c.l.b16 %v1718
    %v2107 = vunpack.c.h.b16 %v1718
    %v2108 = vunpack.c.l.b16 %v1719
    %v2109 = vunpack.c.h.b16 %v1719
    %v2110 = vunpack.c.l.b16 %v1720
    %v2111 = vunpack.c.h.b16 %v1720
    %v2112 = vunpack.c.l.b16 %v1721
    %v2113 = vunpack.c.h.b16 %v1721
    %v2114 = vunpack.c.l.b16 %v1722
    %v2115 = vunpack.c.h.b16 %v1722
    %v2116 = vunpack.c.l.b16 %v1723
    %v2117 = vunpack.c.h.b16 %v1723
    %v2118 = vunpack.c.l.b16 %v1724
    %v2119 = vunpack.c.h.b16 %v1724
    %v2120 = vunpack.c.l.b16 %v1725
    %v2121 = vunpack.c.h.b16 %v1725
    %v2122 = vunpack.c.l.b16 %v1726
    %v2123 = vunpack.c.h.b16 %v1726
    %v2124 = vunpack.c.l.b16 %v1727
    %v2125 = vunpack.c.h.b16 %v1727
    %v2126 = vunpack.c.l.b16 %v1728
    %v2127 = vunpack.c.h.b16 %v1728
    %v2128 = vunpack.c.l.b16 %v1729
    %v2129 = vunpack.c.h.b16 %v1729
    %v2130 = vunpack.c.l.b16 %v1730
    %v2131 = vunpack.c.h.b16 %v1730
    %v2132 = vunpack.c.l.b16 %v1731
    %v2133 = vunpack.c.h.b16 %v1731
    %v2134 = vunpack.c.l.b16 %v1732
    %v2135 = vunpack.c.h.b16 %v1732
    %v2136 = vunpack.c.l.b16 %v1733
    %v2137 = vunpack.c.h.b16 %v1733
    %v2138 = vunpack.c.l.b16 %v1734
    %v2139 = vunpack.c.h.b16 %v1734
    %v2140 = vunpack.c.l.b16 %v1735
    %v2141 = vunpack.c.h.b16 %v1735
    %v2142 = vpack.c.b16 %v1890, %v1886
    %v2143 = vpack.c.b16 %v1891, %v1887
    %v2144 = vpack.c.b16 %v1892, %v1888
    %v2145 = vpack.c.b16 %v1893, %v1889
    %v2146 = vpack.c.b16 %v1898, %v1894
    %v2147 = vpack.c.b16 %v1899, %v1895
    %v2148 = vpack.c.b16 %v1900, %v1896
    %v2149 = vpack.c.b16 %v1901, %v1897
    %v2150 = vpack.c.b16 %v1906, %v1902
    %v2151 = vpack.c.b16 %v1907, %v1903
    %v2152 = vpack.c.b16 %v1908, %v1904
    %v2153 = vpack.c.b16 %v1909, %v1905
    %v2154 = vpack.c.b16 %v1914, %v1910
    %v2155 = vpack.c.b16 %v1915, %v1911
    %v2156 = vpack.c.b16 %v1916, %v1912
    %v2157 = vpack.c.b16 %v1917, %v1913
    %v2158 = vpack.c.b16 %v1922, %v1918
    %v2159 = vpack.c.b16 %v1923, %v1919
    %v2160 = vpack.c.b16 %v1924, %v1920
    %v2161 = vpack.c.b16 %v1925, %v1921
    %v2162 = vpack.c.b16 %v1930, %v1926
    %v2163 = vpack.c.b16 %v1931, %v1927
    %v2164 = vpack.c.b16 %v1932, %v1928
    %v2165 = vpack.c.b16 %v1933, %v1929
    %v2166 = vpack.c.b16 %v1938, %v1934
    %v2167 = vpack.c.b16 %v1939, %v1935
    %v2168 = vpack.c.b16 %v1940, %v1936
    %v2169 = vpack.c.b16 %v1941, %v1937
    %v2170 = vpack.c.b16 %v1946, %v1942
    %v2171 = vpack.c.b16 %v1947, %v1943
    %v2172 = vpack.c.b16 %v1948, %v1944
    %v2173 = vpack.c.b16 %v1949, %v1945
    %v2174 = vpack.c.b16 %v1954, %v1950
    %v2175 = vpack.c.b16 %v1955, %v1951
    %v2176 = vpack.c.b16 %v1956, %v1952
    %v2177 = vpack.c.b16 %v1957, %v1953
    %v2178 = vpack.c.b16 %v1962, %v1958
    %v2179 = vpack.c.b16 %v1963, %v1959
    %v2180 = vpack.c.b16 %v1964, %v1960
    %v2181 = vpack.c.b16 %v1965, %v1961
    %v2182 = vpack.c.b16 %v1970, %v1966
    %v2183 = vpack.c.b16 %v1971, %v1967
    %v2184 = vpack.c.b16 %v1972, %v1968
    %v2185 = vpack.c.b16 %v1973, %v1969
    %v2186 = vpack.c.b16 %v1978, %v1974
    %v2187 = vpack.c.b16 %v1979, %v1975
    %v2188 = vpack.c.b16 %v1980, %v1976
    %v2189 = vpack.c.b16 %v1981, %v1977
    %v2190 = vpack.c.b16 %v1986, %v1982
    %v2191 = vpack.c.b16 %v1987, %v1983
    %v2192 = vpack.c.b16 %v1988, %v1984
    %v2193 = vpack.c.b16 %v1989, %v1985
    %v2194 = vpack.c.b16 %v1994, %v1990
    %v2195 = vpack.c.b16 %v1995, %v1991
    %v2196 = vpack.c.b16 %v1996, %v1992
    %v2197 = vpack.c.b16 %v1997, %v1993
    %v2198 = vpack.c.b16 %v2002, %v1998
    %v2199 = vpack.c.b16 %v2003, %v1999
    %v2200 = vpack.c.b16 %v2004, %v2000
    %v2201 = vpack.c.b16 %v2005, %v2001
    %v2202 = vpack.c.b16 %v2010, %v2006
    %v2203 = vpack.c.b16 %v2011, %v2007
    %v2204 = vpack.c.b16 %v2012, %v2008
    %v2205 = vpack.c.b16 %v2013, %v2009
    %v2206 = vpack.c.b16 %v2018, %v2014
    %v2207 = vpack.c.b16 %v2019, %v2015
    %v2208 = vpack.c.b16 %v2020, %v2016
    %v2209 = vpack.c.b16 %v2021, %v2017
    %v2210 = vpack.c.b16 %v2026, %v2022
    %v2211 = vpack.c.b16 %v2027, %v2023
    %v2212 = vpack.c.b16 %v2028, %v2024
    %v2213 = vpack.c.b16 %v2029, %v2025
    %v2214 = vpack.c.b16 %v2034, %v2030
    %v2215 = vpack.c.b16 %v2035, %v2031
    %v2216 = vpack.c.b16 %v2036, %v2032
    %v2217 = vpack.c.b16 %v2037, %v2033
    %v2218 = vpack.c.b16 %v2042, %v2038
    %v2219 = vpack.c.b16 %v2043, %v2039
    %v2220 = vpack.c.b16 %v2044, %v2040
    %v2221 = vpack.c.b16 %v2045, %v2041
    %v2222 = vpack.c.b16 %v2050, %v2046
    %v2223 = vpack.c.b16 %v2051, %v2047
    %v2224 = vpack.c.b16 %v2052, %v2048
    %v2225 = vpack.c.b16 %v2053, %v2049
    %v2226 = vpack.c.b16 %v2058, %v2054
    %v2227 = vpack.c.b16 %v2059, %v2055
    %v2228 = vpack.c.b16 %v2060, %v2056
    %v2229 = vpack.c.b16 %v2061, %v2057
    %v2230 = vpack.c.b16 %v2066, %v2062
    %v2231 = vpack.c.b16 %v2067, %v2063
    %v2232 = vpack.c.b16 %v2068, %v2064
    %v2233 = vpack.c.b16 %v2069, %v2065
    %v2234 = vpack.c.b16 %v2074, %v2070
    %v2235 = vpack.c.b16 %v2075, %v2071
    %v2236 = vpack.c.b16 %v2076, %v2072
    %v2237 = vpack.c.b16 %v2077, %v2073
    %v2238 = vpack.c.b16 %v2082, %v2078
    %v2239 = vpack.c.b16 %v2083, %v2079
    %v2240 = vpack.c.b16 %v2084, %v2080
    %v2241 = vpack.c.b16 %v2085, %v2081
    %v2242 = vpack.c.b16 %v2090, %v2086
    %v2243 = vpack.c.b16 %v2091, %v2087
    %v2244 = vpack.c.b16 %v2092, %v2088
    %v2245 = vpack.c.b16 %v2093, %v2089
    %v2246 = vpack.c.b16 %v2098, %v2094
    %v2247 = vpack.c.b16 %v2099, %v2095
    %v2248 = vpack.c.b16 %v2100, %v2096
    %v2249 = vpack.c.b16 %v2101, %v2097
    %v2250 = vpack.c.b16 %v2106, %v2102
    %v2251 = vpack.c.b16 %v2107, %v2103
    %v2252 = vpack.c.b16 %v2108, %v2104
    %v2253 = vpack.c.b16 %v2109, %v2105
    %v2254 = vpack.c.b16 %v2114, %v2110
    %v2255 = vpack.c.b16 %v2115, %v2111
    %v2256 = vpack.c.b16 %v2116, %v2112
    %v2257 = vpack.c.b16 %v2117, %v2113
    %v2258 = vpack.c.b16 %v2122, %v2118
    %v2259 = vpack.c.b16 %v2123, %v2119
    %v2260 = vpack.c.b16 %v2124, %v2120
    %v2261 = vpack.c.b16 %v2125, %v2121
    %v2262 = vpack.c.b16 %v2130, %v2126
    %v2263 = vpack.c.b16 %v2131, %v2127
    %v2264 = vpack.c.b16 %v2132, %v2128
    %v2265 = vpack.c.b16 %v2133, %v2129
    %v2266 = vpack.c.b16 %v2138, %v2134
    %v2267 = vpack.c.b16 %v2139, %v2135
    %v2268 = vpack.c.b16 %v2140, %v2136
    %v2269 = vpack.c.b16 %v2141, %v2137
    %2398 = vmatprep.subr.bf16.mxu0 %v2171
    %2399 = vmatpush1.bf16.msra.mxu0 %v2170
    %2400 = vmatprep.subr.bf16.mxu0 %v2167
    %2401 = vmatpush1.bf16.msra.mxu0 %v2166
    %2402 = vmatprep.subr.bf16.mxu0 %v2163
    %2403 = vmatpush1.bf16.msra.mxu0 %v2162
    %2404 = vmatprep.subr.bf16.mxu0 %v2159
    %2405 = vmatpush1.bf16.msra.mxu0 %v2158
    %2406 = vmatprep.subr.bf16.mxu0 %v2155
    %2407 = vmatpush1.bf16.msra.mxu0 %v2154
    %2408 = vmatprep.subr.bf16.mxu0 %v2151
    %2409 = vmatpush1.bf16.msra.mxu0 %v2150
    %2410 = vmatprep.subr.bf16.mxu0 %v2147
    %2411 = vmatpush1.bf16.msra.mxu0 %v2146
    %2412 = vmatprep.subr.bf16.mxu0 %v2143
    %2413 = vmatpush1.bf16.msra.mxu0 %v2142
    %2414 = vmatprep.subr.bf16.mxu0 %v2203
    %2415 = vmatpush2.bf16.msra.mxu0 %v2202
    %2416 = vmatprep.subr.bf16.mxu0 %v2199
    %2417 = vmatpush2.bf16.msra.mxu0 %v2198
    %2418 = vmatprep.subr.bf16.mxu0 %v2195
    %2419 = vmatpush2.bf16.msra.mxu0 %v2194
    %2420 = vmatprep.subr.bf16.mxu0 %v2191
    %2421 = vmatpush2.bf16.msra.mxu0 %v2190
    %2422 = vmatprep.subr.bf16.mxu0 %v2187
    %2423 = vmatpush2.bf16.msra.mxu0 %v2186
    %2424 = vmatprep.subr.bf16.mxu0 %v2183
    %2425 = vmatpush2.bf16.msra.mxu0 %v2182
    %2426 = vmatprep.subr.bf16.mxu0 %v2179
    %2427 = vmatpush2.bf16.msra.mxu0 %v2178
    %2428 = vmatprep.subr.bf16.mxu0 %v2175
    %2429 = vmatpush2.bf16.msra.mxu0 %v2174
    %2430 = vmatprep.mubr.bf16.mxu0 %v1605
    %2431 = vmatmul.mubr.bf16.gmra.mxu0 %v1604
    %v2432 = vpop.f32.mrf.mxu0
    %v2433 = vadd.f32 %v1741, %v2432
    %v2434 = vpop.f32.mrf.mxu0
    %v2435 = vadd.f32 %v1745, %v2434
    %v2436 = vpop.f32.mrf.mxu0
    %v2437 = vpop.f32.mrf.mxu0
    %2438 = vdwg.mxu0
    %2439 = vmatprep.subr.bf16.mxu0 %v2235
    %2440 = vmatpush1.bf16.msra.mxu0 %v2234
    %2441 = vmatprep.subr.bf16.mxu0 %v2231
    %2442 = vmatpush1.bf16.msra.mxu0 %v2230
    %2443 = vmatprep.subr.bf16.mxu0 %v2227
    %2444 = vmatpush1.bf16.msra.mxu0 %v2226
    %2445 = vmatprep.subr.bf16.mxu0 %v2223
    %2446 = vmatpush1.bf16.msra.mxu0 %v2222
    %2447 = vmatprep.subr.bf16.mxu0 %v2219
    %2448 = vmatpush1.bf16.msra.mxu0 %v2218
    %2449 = vmatprep.subr.bf16.mxu0 %v2215
    %2450 = vmatpush1.bf16.msra.mxu0 %v2214
    %2451 = vmatprep.subr.bf16.mxu0 %v2211
    %2452 = vmatpush1.bf16.msra.mxu0 %v2210
    %2453 = vmatprep.subr.bf16.mxu0 %v2207
    %2454 = vmatpush1.bf16.msra.mxu0 %v2206
    %2455 = vmatprep.subr.bf16.mxu0 %v2267
    %2456 = vmatpush2.bf16.msra.mxu0 %v2266
    %2457 = vmatprep.subr.bf16.mxu0 %v2263
    %2458 = vmatpush2.bf16.msra.mxu0 %v2262
    %2459 = vmatprep.subr.bf16.mxu0 %v2259
    %2460 = vmatpush2.bf16.msra.mxu0 %v2258
    %2461 = vmatprep.subr.bf16.mxu0 %v2255
    %2462 = vmatpush2.bf16.msra.mxu0 %v2254
    %2463 = vmatprep.subr.bf16.mxu0 %v2251
    %2464 = vmatpush2.bf16.msra.mxu0 %v2250
    %2465 = vmatprep.subr.bf16.mxu0 %v2247
    %2466 = vmatpush2.bf16.msra.mxu0 %v2246
    %2467 = vmatprep.subr.bf16.mxu0 %v2243
    %2468 = vmatpush2.bf16.msra.mxu0 %v2242
    %2469 = vmatprep.subr.bf16.mxu0 %v2239
    %2470 = vmatpush2.bf16.msra.mxu0 %v2238
    %2471 = vmatprep.mubr.bf16.mxu0 %v1607
    %2472 = vmatmul.mubr.bf16.gmra.mxu0 %v1606
    %v2473 = vpop.f32.mrf.mxu0
    %v2474 = vadd.f32 %v2433, %v2473
    %v2475 = vpop.f32.mrf.mxu0
    %v2476 = vadd.f32 %v2435, %v2475
    %v2477 = vpop.f32.mrf.mxu0
    %v2478 = vpop.f32.mrf.mxu0
    %2479 = vdwg.mxu0
    %2480 = vmatprep.subr.bf16.mxu0 %v2173
    %2481 = vmatpush1.bf16.msra.mxu0 %v2172
    %2482 = vmatprep.subr.bf16.mxu0 %v2169
    %2483 = vmatpush1.bf16.msra.mxu0 %v2168
    %2484 = vmatprep.subr.bf16.mxu0 %v2165
    %2485 = vmatpush1.bf16.msra.mxu0 %v2164
    %2486 = vmatprep.subr.bf16.mxu0 %v2161
    %2487 = vmatpush1.bf16.msra.mxu0 %v2160
    %2488 = vmatprep.subr.bf16.mxu0 %v2157
    %2489 = vmatpush1.bf16.msra.mxu0 %v2156
    %2490 = vmatprep.subr.bf16.mxu0 %v2153
    %2491 = vmatpush1.bf16.msra.mxu0 %v2152
    %2492 = vmatprep.subr.bf16.mxu0 %v2149
    %2493 = vmatpush1.bf16.msra.mxu0 %v2148
    %2494 = vmatprep.subr.bf16.mxu0 %v2145
    %2495 = vmatpush1.bf16.msra.mxu0 %v2144
    %2496 = vmatprep.subr.bf16.mxu0 %v2205
    %2497 = vmatpush2.bf16.msra.mxu0 %v2204
    %2498 = vmatprep.subr.bf16.mxu0 %v2201
    %2499 = vmatpush2.bf16.msra.mxu0 %v2200
    %2500 = vmatprep.subr.bf16.mxu0 %v2197
    %2501 = vmatpush2.bf16.msra.mxu0 %v2196
    %2502 = vmatprep.subr.bf16.mxu0 %v2193
    %2503 = vmatpush2.bf16.msra.mxu0 %v2192
    %2504 = vmatprep.subr.bf16.mxu0 %v2189
    %2505 = vmatpush2.bf16.msra.mxu0 %v2188
    %2506 = vmatprep.subr.bf16.mxu0 %v2185
    %2507 = vmatpush2.bf16.msra.mxu0 %v2184
    %2508 = vmatprep.subr.bf16.mxu0 %v2181
    %2509 = vmatpush2.bf16.msra.mxu0 %v2180
    %2510 = vmatprep.subr.bf16.mxu0 %v2177
    %2511 = vmatpush2.bf16.msra.mxu0 %v2176
    %2512 = vmatprep.mubr.bf16.mxu0 %v1605
    %2513 = vmatmul.mubr.bf16.gmra.mxu0 %v1604
    %v2514 = vpop.f32.mrf.mxu0
    %v2515 = vadd.f32 %v1749, %v2514
    %v2516 = vpop.f32.mrf.mxu0
    %v2517 = vadd.f32 %v1753, %v2516
    %v2518 = vpop.f32.mrf.mxu0
    %v2519 = vpop.f32.mrf.mxu0
    %2520 = vdwg.mxu0
    %2521 = vmatprep.subr.bf16.mxu0 %v2237
    %2522 = vmatpush1.bf16.msra.mxu0 %v2236
    %2523 = vmatprep.subr.bf16.mxu0 %v2233
    %2524 = vmatpush1.bf16.msra.mxu0 %v2232
    %2525 = vmatprep.subr.bf16.mxu0 %v2229
    %2526 = vmatpush1.bf16.msra.mxu0 %v2228
    %2527 = vmatprep.subr.bf16.mxu0 %v2225
    %2528 = vmatpush1.bf16.msra.mxu0 %v2224
    %2529 = vmatprep.subr.bf16.mxu0 %v2221
    %2530 = vmatpush1.bf16.msra.mxu0 %v2220
    %2531 = vmatprep.subr.bf16.mxu0 %v2217
    %2532 = vmatpush1.bf16.msra.mxu0 %v2216
    %2533 = vmatprep.subr.bf16.mxu0 %v2213
    %2534 = vmatpush1.bf16.msra.mxu0 %v2212
    %2535 = vmatprep.subr.bf16.mxu0 %v2209
    %2536 = vmatpush1.bf16.msra.mxu0 %v2208
    %2537 = vmatprep.subr.bf16.mxu0 %v2269
    %2538 = vmatpush2.bf16.msra.mxu0 %v2268
    %2539 = vmatprep.subr.bf16.mxu0 %v2265
    %2540 = vmatpush2.bf16.msra.mxu0 %v2264
    %2541 = vmatprep.subr.bf16.mxu0 %v2261
    %2542 = vmatpush2.bf16.msra.mxu0 %v2260
    %2543 = vmatprep.subr.bf16.mxu0 %v2257
    %2544 = vmatpush2.bf16.msra.mxu0 %v2256
    %2545 = vmatprep.subr.bf16.mxu0 %v2253
    %2546 = vmatpush2.bf16.msra.mxu0 %v2252
    %2547 = vmatprep.subr.bf16.mxu0 %v2249
    %2548 = vmatpush2.bf16.msra.mxu0 %v2248
    %2549 = vmatprep.subr.bf16.mxu0 %v2245
    %2550 = vmatpush2.bf16.msra.mxu0 %v2244
    %2551 = vmatprep.subr.bf16.mxu0 %v2241
    %2552 = vmatpush2.bf16.msra.mxu0 %v2240
    %2553 = vmatprep.mubr.bf16.mxu0 %v1607
    %2554 = vmatmul.mubr.bf16.gmra.mxu0 %v1606
    %v2555 = vpop.f32.mrf.mxu0
    %v2556 = vadd.f32 %v2515, %v2555
    %v2557 = vpop.f32.mrf.mxu0
    %v2558 = vadd.f32 %v2517, %v2557
    %v2559 = vpop.f32.mrf.mxu0
    %v2560 = vpop.f32.mrf.mxu0
    %2561 = vdwg.mxu0
    %v2562 = vmax.f32 %v2474, 0.0
    %v2563 = vmax.f32 %v2476, 0.0
    %v2564 = vmax.f32 %v2556, 0.0
    %v2565 = vmax.f32 %v2558, 0.0
    %v2566 = vpack.c.bf16 %v2562, %v2562
    %v2567 = vpack.c.bf16 %v2563, %v2563
    %v2568 = vpack.c.bf16 %v2564, %v2564
    %v2569 = vpack.c.bf16 %v2565, %v2565
    %v2570 = vld [vmem:[%s5] sm:$0xf]
    %v2571 = vld [vmem:[%s5 + $0x4] sm:$0xf]
    %v2572 = vld [vmem:[%s5 + $0x8] sm:$0xf]
    %v2573 = vld [vmem:[%s5 + $0xc] sm:$0xf]
    %v2574 = vld [vmem:[%s5 + $0x10] sm:$0xf]
    %v2575 = vld [vmem:[%s5 + $0x14] sm:$0xf]
    %v2576 = vld [vmem:[%s5 + $0x18] sm:$0xf]
    %v2577 = vld [vmem:[%s5 + $0x1c] sm:$0xf]
    %v2578 = vld [vmem:[%s5 + $0x20] sm:$0xf]
    %v2579 = vld [vmem:[%s5 + $0x24] sm:$0xf]
    %v2580 = vld [vmem:[%s5 + $0x28] sm:$0xf]
    %v2581 = vld [vmem:[%s5 + $0x2c] sm:$0xf]
    %v2582 = vld [vmem:[%s5 + $0x30] sm:$0xf]
    %v2583 = vld [vmem:[%s5 + $0x34] sm:$0xf]
    %v2584 = vld [vmem:[%s5 + $0x38] sm:$0xf]
    %v2585 = vld [vmem:[%s5 + $0x3c] sm:$0xf]
    %v2586 = vld [vmem:[%s5 + $0x40] sm:$0xf]
    %v2587 = vld [vmem:[%s5 + $0x44] sm:$0xf]
    %v2588 = vld [vmem:[%s5 + $0x48] sm:$0xf]
    %v2589 = vld [vmem:[%s5 + $0x4c] sm:$0xf]
    %v2590 = vld [vmem:[%s5 + $0x50] sm:$0xf]
    %v2591 = vld [vmem:[%s5 + $0x54] sm:$0xf]
    %v2592 = vld [vmem:[%s5 + $0x58] sm:$0xf]
    %v2593 = vld [vmem:[%s5 + $0x5c] sm:$0xf]
    %v2594 = vld [vmem:[%s5 + $0x60] sm:$0xf]
    %v2595 = vld [vmem:[%s5 + $0x64] sm:$0xf]
    %v2596 = vld [vmem:[%s5 + $0x68] sm:$0xf]
    %v2597 = vld [vmem:[%s5 + $0x6c] sm:$0xf]
    %v2598 = vld [vmem:[%s5 + $0x70] sm:$0xf]
    %v2599 = vld [vmem:[%s5 + $0x74] sm:$0xf]
    %v2600 = vld [vmem:[%s5 + $0x78] sm:$0xf]
    %v2601 = vld [vmem:[%s5 + $0x7c] sm:$0xf]
    %v2602 = vld [vmem:[%s5 + $0x80] sm:$0xf]
    %v2603 = vld [vmem:[%s5 + $0x84] sm:$0xf]
    %v2604 = vld [vmem:[%s5 + $0x88] sm:$0xf]
    %v2605 = vld [vmem:[%s5 + $0x8c] sm:$0xf]
    %v2606 = vld [vmem:[%s5 + $0x90] sm:$0xf]
    %v2607 = vld [vmem:[%s5 + $0x94] sm:$0xf]
    %v2608 = vld [vmem:[%s5 + $0x98] sm:$0xf]
    %v2609 = vld [vmem:[%s5 + $0x9c] sm:$0xf]
    %v2610 = vld [vmem:[%s5 + $0xa0] sm:$0xf]
    %v2611 = vld [vmem:[%s5 + $0xa4] sm:$0xf]
    %v2612 = vld [vmem:[%s5 + $0xa8] sm:$0xf]
    %v2613 = vld [vmem:[%s5 + $0xac] sm:$0xf]
    %v2614 = vld [vmem:[%s5 + $0xb0] sm:$0xf]
    %v2615 = vld [vmem:[%s5 + $0xb4] sm:$0xf]
    %v2616 = vld [vmem:[%s5 + $0xb8] sm:$0xf]
    %v2617 = vld [vmem:[%s5 + $0xbc] sm:$0xf]
    %v2618 = vld [vmem:[%s5 + $0xc0] sm:$0xf]
    %v2619 = vld [vmem:[%s5 + $0xc4] sm:$0xf]
    %v2620 = vld [vmem:[%s5 + $0xc8] sm:$0xf]
    %v2621 = vld [vmem:[%s5 + $0xcc] sm:$0xf]
    %v2622 = vld [vmem:[%s5 + $0xd0] sm:$0xf]
    %v2623 = vld [vmem:[%s5 + $0xd4] sm:$0xf]
    %v2624 = vld [vmem:[%s5 + $0xd8] sm:$0xf]
    %v2625 = vld [vmem:[%s5 + $0xdc] sm:$0xf]
    %v2626 = vld [vmem:[%s5 + $0xe0] sm:$0xf]
    %v2627 = vld [vmem:[%s5 + $0xe4] sm:$0xf]
    %v2628 = vld [vmem:[%s5 + $0xe8] sm:$0xf]
    %v2629 = vld [vmem:[%s5 + $0xec] sm:$0xf]
    %v2630 = vld [vmem:[%s5 + $0xf0] sm:$0xf]
    %v2631 = vld [vmem:[%s5 + $0xf4] sm:$0xf]
    %v2632 = vld [vmem:[%s5 + $0xf8] sm:$0xf]
    %v2633 = vld [vmem:[%s5 + $0xfc] sm:$0xf]
    %v2634 = vld [vmem:[%s6] sm:$0x1]
    %v2636 = vlaneseq
    %v2637 = vshrl.u32 %v2636, 7
    %v2638 = vsub.s32 0, %v2637
    %v2639 = vrot.slane %v2634, %v2638
    %v2705 = vunpack.c.l.b16 %v2570
    %v2706 = vunpack.c.l.b16 %v2571
    %v2707 = vunpack.c.l.b16 %v2572
    %v2708 = vunpack.c.l.b16 %v2573
    %v2709 = vunpack.c.l.b16 %v2574
    %v2710 = vunpack.c.l.b16 %v2575
    %v2711 = vunpack.c.l.b16 %v2576
    %v2712 = vunpack.c.l.b16 %v2577
    %v2713 = vunpack.c.l.b16 %v2578
    %v2714 = vunpack.c.l.b16 %v2579
    %v2715 = vunpack.c.l.b16 %v2580
    %v2716 = vunpack.c.l.b16 %v2581
    %v2717 = vunpack.c.l.b16 %v2582
    %v2718 = vunpack.c.l.b16 %v2583
    %v2719 = vunpack.c.l.b16 %v2584
    %v2720 = vunpack.c.l.b16 %v2585
    %v2721 = vunpack.c.l.b16 %v2586
    %v2722 = vunpack.c.l.b16 %v2587
    %v2723 = vunpack.c.l.b16 %v2588
    %v2724 = vunpack.c.l.b16 %v2589
    %v2725 = vunpack.c.l.b16 %v2590
    %v2726 = vunpack.c.l.b16 %v2591
    %v2727 = vunpack.c.l.b16 %v2592
    %v2728 = vunpack.c.l.b16 %v2593
    %v2729 = vunpack.c.l.b16 %v2594
    %v2730 = vunpack.c.l.b16 %v2595
    %v2731 = vunpack.c.l.b16 %v2596
    %v2732 = vunpack.c.l.b16 %v2597
    %v2733 = vunpack.c.l.b16 %v2598
    %v2734 = vunpack.c.l.b16 %v2599
    %v2735 = vunpack.c.l.b16 %v2600
    %v2736 = vunpack.c.l.b16 %v2601
    %v2737 = vunpack.c.l.b16 %v2602
    %v2738 = vunpack.c.l.b16 %v2603
    %v2739 = vunpack.c.l.b16 %v2604
    %v2740 = vunpack.c.l.b16 %v2605
    %v2741 = vunpack.c.l.b16 %v2606
    %v2742 = vunpack.c.l.b16 %v2607
    %v2743 = vunpack.c.l.b16 %v2608
    %v2744 = vunpack.c.l.b16 %v2609
    %v2745 = vunpack.c.l.b16 %v2610
    %v2746 = vunpack.c.l.b16 %v2611
    %v2747 = vunpack.c.l.b16 %v2612
    %v2748 = vunpack.c.l.b16 %v2613
    %v2749 = vunpack.c.l.b16 %v2614
    %v2750 = vunpack.c.l.b16 %v2615
    %v2751 = vunpack.c.l.b16 %v2616
    %v2752 = vunpack.c.l.b16 %v2617
    %v2753 = vunpack.c.l.b16 %v2618
    %v2754 = vunpack.c.l.b16 %v2619
    %v2755 = vunpack.c.l.b16 %v2620
    %v2756 = vunpack.c.l.b16 %v2621
    %v2757 = vunpack.c.l.b16 %v2622
    %v2758 = vunpack.c.l.b16 %v2623
    %v2759 = vunpack.c.l.b16 %v2624
    %v2760 = vunpack.c.l.b16 %v2625
    %v2761 = vunpack.c.l.b16 %v2626
    %v2762 = vunpack.c.l.b16 %v2627
    %v2763 = vunpack.c.l.b16 %v2628
    %v2764 = vunpack.c.l.b16 %v2629
    %v2765 = vunpack.c.l.b16 %v2630
    %v2766 = vunpack.c.l.b16 %v2631
    %v2767 = vunpack.c.l.b16 %v2632
    %v2768 = vunpack.c.l.b16 %v2633
    %v2769 = vpack.c.b16 %v2706, %v2705
    %v2770 = vpack.c.b16 %v2708, %v2707
    %v2771 = vpack.c.b16 %v2710, %v2709
    %v2772 = vpack.c.b16 %v2712, %v2711
    %v2773 = vpack.c.b16 %v2714, %v2713
    %v2774 = vpack.c.b16 %v2716, %v2715
    %v2775 = vpack.c.b16 %v2718, %v2717
    %v2776 = vpack.c.b16 %v2720, %v2719
    %v2777 = vpack.c.b16 %v2722, %v2721
    %v2778 = vpack.c.b16 %v2724, %v2723
    %v2779 = vpack.c.b16 %v2726, %v2725
    %v2780 = vpack.c.b16 %v2728, %v2727
    %v2781 = vpack.c.b16 %v2730, %v2729
    %v2782 = vpack.c.b16 %v2732, %v2731
    %v2783 = vpack.c.b16 %v2734, %v2733
    %v2784 = vpack.c.b16 %v2736, %v2735
    %v2785 = vpack.c.b16 %v2738, %v2737
    %v2786 = vpack.c.b16 %v2740, %v2739
    %v2787 = vpack.c.b16 %v2742, %v2741
    %v2788 = vpack.c.b16 %v2744, %v2743
    %v2789 = vpack.c.b16 %v2746, %v2745
    %v2790 = vpack.c.b16 %v2748, %v2747
    %v2791 = vpack.c.b16 %v2750, %v2749
    %v2792 = vpack.c.b16 %v2752, %v2751
    %v2793 = vpack.c.b16 %v2754, %v2753
    %v2794 = vpack.c.b16 %v2756, %v2755
    %v2795 = vpack.c.b16 %v2758, %v2757
    %v2796 = vpack.c.b16 %v2760, %v2759
    %v2797 = vpack.c.b16 %v2762, %v2761
    %v2798 = vpack.c.b16 %v2764, %v2763
    %v2799 = vpack.c.b16 %v2766, %v2765
    %v2800 = vpack.c.b16 %v2768, %v2767
    %2833 = vmatprep.subr.bf16.mxu0 0
    %2834 = vmatpush1.bf16.msra.mxu0 %v2776
    %2835 = vmatprep.subr.bf16.mxu0 0
    %2836 = vmatpush1.bf16.msra.mxu0 %v2775
    %2837 = vmatprep.subr.bf16.mxu0 0
    %2838 = vmatpush1.bf16.msra.mxu0 %v2774
    %2839 = vmatprep.subr.bf16.mxu0 0
    %2840 = vmatpush1.bf16.msra.mxu0 %v2773
    %2841 = vmatprep.subr.bf16.mxu0 0
    %2842 = vmatpush1.bf16.msra.mxu0 %v2772
    %2843 = vmatprep.subr.bf16.mxu0 0
    %2844 = vmatpush1.bf16.msra.mxu0 %v2771
    %2845 = vmatprep.subr.bf16.mxu0 0
    %2846 = vmatpush1.bf16.msra.mxu0 %v2770
    %2847 = vmatprep.subr.bf16.mxu0 0
    %2848 = vmatpush1.bf16.msra.mxu0 %v2769
    %2849 = vmatprep.subr.bf16.mxu0 0
    %2850 = vmatpush2.bf16.msra.mxu0 %v2784
    %2851 = vmatprep.subr.bf16.mxu0 0
    %2852 = vmatpush2.bf16.msra.mxu0 %v2783
    %2853 = vmatprep.subr.bf16.mxu0 0
    %2854 = vmatpush2.bf16.msra.mxu0 %v2782
    %2855 = vmatprep.subr.bf16.mxu0 0
    %2856 = vmatpush2.bf16.msra.mxu0 %v2781
    %2857 = vmatprep.subr.bf16.mxu0 0
    %2858 = vmatpush2.bf16.msra.mxu0 %v2780
    %2859 = vmatprep.subr.bf16.mxu0 0
    %2860 = vmatpush2.bf16.msra.mxu0 %v2779
    %2861 = vmatprep.subr.bf16.mxu0 0
    %2862 = vmatpush2.bf16.msra.mxu0 %v2778
    %2863 = vmatprep.subr.bf16.mxu0 0
    %2864 = vmatpush2.bf16.msra.mxu0 %v2777
    %2865 = vmatprep.mubr.bf16.mxu0 %v2567
    %2866 = vmatmul.mubr.bf16.gmra.mxu0 %v2566
    %v2867 = vpop.f32.mrf.mxu0
    %v2868 = vadd.f32 %v2639, %v2867
    %v2869 = vpop.f32.mrf.mxu0
    %v2870 = vpop.f32.mrf.mxu0
    %v2871 = vpop.f32.mrf.mxu0
    %2872 = vdwg.mxu0
    %2873 = vmatprep.subr.bf16.mxu0 0
    %2874 = vmatpush1.bf16.msra.mxu0 %v2792
    %2875 = vmatprep.subr.bf16.mxu0 0
    %2876 = vmatpush1.bf16.msra.mxu0 %v2791
    %2877 = vmatprep.subr.bf16.mxu0 0
    %2878 = vmatpush1.bf16.msra.mxu0 %v2790
    %2879 = vmatprep.subr.bf16.mxu0 0
    %2880 = vmatpush1.bf16.msra.mxu0 %v2789
    %2881 = vmatprep.subr.bf16.mxu0 0
    %2882 = vmatpush1.bf16.msra.mxu0 %v2788
    %2883 = vmatprep.subr.bf16.mxu0 0
    %2884 = vmatpush1.bf16.msra.mxu0 %v2787
    %2885 = vmatprep.subr.bf16.mxu0 0
    %2886 = vmatpush1.bf16.msra.mxu0 %v2786
    %2887 = vmatprep.subr.bf16.mxu0 0
    %2888 = vmatpush1.bf16.msra.mxu0 %v2785
    %2889 = vmatprep.subr.bf16.mxu0 0
    %2890 = vmatpush2.bf16.msra.mxu0 %v2800
    %2891 = vmatprep.subr.bf16.mxu0 0
    %2892 = vmatpush2.bf16.msra.mxu0 %v2799
    %2893 = vmatprep.subr.bf16.mxu0 0
    %2894 = vmatpush2.bf16.msra.mxu0 %v2798
    %2895 = vmatprep.subr.bf16.mxu0 0
    %2896 = vmatpush2.bf16.msra.mxu0 %v2797
    %2897 = vmatprep.subr.bf16.mxu0 0
    %2898 = vmatpush2.bf16.msra.mxu0 %v2796
    %2899 = vmatprep.subr.bf16.mxu0 0
    %2900 = vmatpush2.bf16.msra.mxu0 %v2795
    %2901 = vmatprep.subr.bf16.mxu0 0
    %2902 = vmatpush2.bf16.msra.mxu0 %v2794
    %2903 = vmatprep.subr.bf16.mxu0 0
    %2904 = vmatpush2.bf16.msra.mxu0 %v2793
    %2905 = vmatprep.mubr.bf16.mxu0 %v2569
    %2906 = vmatmul.mubr.bf16.gmra.mxu0 %v2568
    %v2907 = vpop.f32.mrf.mxu0
    %v2908 = vadd.f32 %v2868, %v2907
    %v2909 = vpop.f32.mrf.mxu0
    %v2910 = vpop.f32.mrf.mxu0
    %v2911 = vpop.f32.mrf.mxu0
    %2912 = vdwg.mxu0
    %2913 = vst [vmem:[#allocation7] sm:$0xff] %v2908
    // Predicated region
    $region38: #{neural_network_forward.1} parent=1 // pred_check
      _
    $region39: #{neural_network_forward.1} parent=1 // pred_check_branch
      %2915 = sbr.rel (0) target = $region41
    $region40: #{neural_network_forward.1} parent=1 // pred_region
      %s2917 = ssub.s32 128, 128
      %2918 = vsyncadd [#allocation4], %s2917
      %s2920 = sshll.u32 [#allocation7], 4
      %s2921 = int_to_ptr.vmem [resolvable:$true] %s2920
      %2923 = dma.vmem_to_hbm [thread:$0]  %s2921, 128, %s7, [#allocation4]
    $region41: #{neural_network_forward.1} parent=1 // pred_fallthru
      _
    // Predicated region
    $region42: #{neural_network_forward.1} parent=1 // pred_check
      _
    $region43: #{neural_network_forward.1} parent=1 // pred_check_branch
      %2925 = sbr.rel (0) target = $region45
    $region44: #{neural_network_forward.1} parent=1 // pred_region
      %2926 = dma.done [#allocation4], 128
    $region45: #{neural_network_forward.1} parent=1 // pred_fallthru
      _
    %2927 = vsyncpa [#allocation3], 1
    %2928 = vsyncpa [#allocation6], 1
    %2929 = vsyncpa [#allocation4], 1

</llo_original>
